<compile_context>
chip_gen: v5e
topology: v5e:2x2
jax: 0.10.0
libtpu: 0.0.40
codegen_flags: <defaults>
</compile_context>

<pallas_src>
import functools

import jax
import jax.numpy as jnp
import numpy as np
from jax.experimental import pallas as pl
from jax.experimental.pallas import tpu as pltpu

LANE = 128     # TPU lane width      (last dim tile)
SUBLANE = 8    # TPU sublane width   (second-to-last dim tile)


def _round_up(x, m):
    return (x + m - 1) // m * m


def _compiler_params(**kw):
    cls = getattr(pltpu, "CompilerParams", None) or getattr(
        pltpu, "TPUCompilerParams", None)
    return cls(**kw) if cls is not None else None


# ----------------------------------------------------------------------------
# Kernel 1: M-tiled GEMM + bias + ReLU (used for the conv1 im2col GEMM)
# ----------------------------------------------------------------------------
def _gemm_bias_relu_kernel(x_ref, w_ref, b_ref, o_ref):
    acc = jnp.dot(x_ref[...], w_ref[...], preferred_element_type=jnp.float32)
    acc = jnp.maximum(acc + b_ref[...], 0.0)          # f32 epilogue
    o_ref[...] = acc.astype(o_ref.dtype)


def gemm_bias_relu(x, w, b, *, max_tm=512):
    """relu(x @ w + b).  x:(M,K) bf16, w:(K,Np) bf16, b:(1,Np) f32 -> (M,Np) bf16.
    M is tiled over the grid ('parallel') so large batches pipeline and can
    split across TensorCores; weights/bias stay resident across the grid."""
    M, K = x.shape
    K2, Np = w.shape
    assert K == K2 and Np % LANE == 0 and K % LANE == 0
    tm = max_tm if M > max_tm else _round_up(M, SUBLANE)
    Mp = _round_up(M, tm)
    if Mp != M:
        x = jnp.pad(x, ((0, Mp - M), (0, 0)))
    out = pl.pallas_call(
        _gemm_bias_relu_kernel,
        out_shape=jax.ShapeDtypeStruct((Mp, Np), jnp.bfloat16),
        grid=(Mp // tm,),
        in_specs=[
            pl.BlockSpec((tm, K), lambda i: (i, 0)),
            pl.BlockSpec((K, Np), lambda i: (0, 0)),
            pl.BlockSpec((1, Np), lambda i: (0, 0)),
        ],
        out_specs=pl.BlockSpec((tm, Np), lambda i: (i, 0)),
        compiler_params=_compiler_params(dimension_semantics=("parallel",)),
    )(x, w, b)
    return out[:M]


# ----------------------------------------------------------------------------
# Kernel 2: fused conv2 GEMM -> conv3 -> linear1 -> linear2 -> linear3
# ----------------------------------------------------------------------------
def _fused_tail_kernel(p2_ref, w2_ref, b2_ref, w3_ref, b3_ref,
                       l1w_ref, l1b_ref, l2w_ref, l2b_ref, l3w_ref, l3b_ref,
                       o_ref, *, n_taps, bpad):
    """All activations stay in VMEM/vregs; lane dims padded to 128, M=bpad."""
    f32 = jnp.float32
    # conv2 GEMM (+bias+ReLU).  p2 rows are ordered (spatial tap t, padded batch).
    a2 = jnp.dot(p2_ref[...], w2_ref[...], preferred_element_type=f32)
    a2 = jnp.maximum(a2 + b2_ref[...], 0.0)                    # (n_taps*bpad, 128)

    # conv3: its 3x3 kernel covers conv2's whole 3x3 output (1x1 spatial out),
    # so it is a sum over the n_taps spatial positions of (bpad,C)x(C,Cout) dots.
    acc3 = jnp.zeros((bpad, w3_ref.shape[-1]), f32)
    for t in range(n_taps):                                     # static unroll
        tap = a2[t * bpad:(t + 1) * bpad, :].astype(jnp.bfloat16)  # sublane-aligned
        acc3 = acc3 + jnp.dot(tap, w3_ref[t], preferred_element_type=f32)
    a3 = jnp.maximum(acc3 + b3_ref[...], 0.0)                   # (bpad, 128)

    # FC head (linear1 -> linear2 -> linear3), bf16 MXU feed, f32 epilogues.
    h = jnp.dot(a3.astype(jnp.bfloat16), l1w_ref[...], preferred_element_type=f32)
    h = jnp.maximum(h + l1b_ref[...], 0.0)
    h = jnp.dot(h.astype(jnp.bfloat16), l2w_ref[...], preferred_element_type=f32)
    h = jnp.maximum(h + l2b_ref[...], 0.0)
    q = jnp.dot(h.astype(jnp.bfloat16), l3w_ref[...], preferred_element_type=f32)
    o_ref[...] = (q + l3b_ref[...]).astype(o_ref.dtype)


def fused_tail(p2, prep, *, bpad):
    n_taps = p2.shape[0] // bpad
    args = (p2, prep["w2"], prep["b2"], prep["w3"], prep["b3"],
            prep["l1w"], prep["l1b"], prep["l2w"], prep["l2b"],
            prep["l3w"], prep["l3b"])

    def _whole(ndim):
        return lambda i: (0,) * ndim

    return pl.pallas_call(
        functools.partial(_fused_tail_kernel, n_taps=n_taps, bpad=bpad),
        out_shape=jax.ShapeDtypeStruct((bpad, prep["l3w"].shape[1]), jnp.float32),
        grid=(1,),
        in_specs=[pl.BlockSpec(a.shape, _whole(a.ndim)) for a in args],
        out_specs=pl.BlockSpec((bpad, prep["l3w"].shape[1]), lambda i: (0, 0)),
    )(*args)


# ----------------------------------------------------------------------------
# Glue: im2col (channels-last) and one-time parameter layout prep
# ----------------------------------------------------------------------------
def _im2col_nhwc(x, kh, kw, stride):
    """x:(B,H,W,C) -> (B,Ho,Wo,C*kh*kw); per-patch flatten order (C,kh,kw),
    matching PyTorch's Conv2d weight.reshape(Cout, -1)."""
    B, H, W, C = x.shape
    Ho = (H - kh) // stride + 1
    Wo = (W - kw) // stride + 1
    taps = []
    for i in range(kh):
        for j in range(kw):
            taps.append(x[:, i:i + stride * (Ho - 1) + 1:stride,
                          j:j + stride * (Wo - 1) + 1:stride, :])
    p = jnp.stack(taps, axis=-1)                        # (B,Ho,Wo,C,kh*kw)
    return p.reshape(B, Ho, Wo, C * kh * kw)


def prepare_params(params):
    """One-time layout prep (hoisted out of the per-forward hot path):
    weights -> (K,N) GEMM layout, K/N zero-padded to multiples of 128, bf16;
    conv3 weight stored per spatial tap (kh*kw, Cin_pad, Cout_pad);
    biases -> (1, N_pad) f32 (epilogues run in f32)."""
    bf16, f32 = jnp.bfloat16, jnp.float32

    def pad2(x, rows, cols):
        return jnp.pad(x, ((0, rows - x.shape[0]), (0, cols - x.shape[1])))

    def wprep(w_nk):                       # torch (N,K) -> (Kp, Np) bf16
        n, k = w_nk.shape
        return pad2(w_nk.T, _round_up(k, LANE), _round_up(n, LANE)).astype(bf16)

    def bprep(b):
        n = b.shape[0]
        return jnp.pad(b, (0, _round_up(n, LANE) - n)).reshape(1, -1).astype(f32)

    c1, c2, c3 = params["c1_w"], params["c2_w"], params["c3_w"]
    co3, ci3, kh3, kw3 = c3.shape
    w3 = jnp.transpose(c3, (2, 3, 1, 0)).reshape(kh3 * kw3, ci3, co3)
    w3 = jnp.pad(w3, ((0, 0),
                      (0, _round_up(ci3, LANE) - ci3),
                      (0, _round_up(co3, LANE) - co3))).astype(bf16)

    prep = {
        "w1": wprep(c1.reshape(c1.shape[0], -1)), "b1": bprep(params["c1_b"]),
        "w2": wprep(c2.reshape(c2.shape[0], -1)), "b2": bprep(params["c2_b"]),
        "w3": w3,                                  "b3": bprep(params["c3_b"]),
        "l1w": wprep(params["l1_w"]), "l1b": bprep(params["l1_b"]),
        "l2w": wprep(params["l2_w"]), "l2b": bprep(params["l2_b"]),
        "l3w": wprep(params["l3_w"]), "l3b": bprep(params["l3_b"]),
    }
    meta = {
        "kernels": (c1.shape[2], c2.shape[2], kh3),
        "strides": (4, 2, 1),
        "c1_out": c1.shape[0],
        "num_actions": params["l3_w"].shape[0],
    }
    return prep, meta


# ----------------------------------------------------------------------------
# ConvDQN forward (2 pallas_calls)
# ----------------------------------------------------------------------------
def conv_dqn_forward(prep, state, *, meta):
    """state: (B, C, H, W) f32 (PyTorch NCHW).  Returns (B, num_actions) f32."""
    B = state.shape[0]
    (k1, k2, k3), (s1, s2, s3) = meta["kernels"], meta["strides"]

    # ---- conv1 as an M-tiled GEMM (Pallas call #1) -------------------------
    x = jnp.transpose(state, (0, 2, 3, 1)).astype(jnp.bfloat16)  # NCHW->NHWC once
    p1 = _im2col_nhwc(x, k1, k1, s1)                             # (B,H1,W1,K1)
    _, H1, W1, K1 = p1.shape
    p1 = p1.reshape(B * H1 * W1, K1)
    p1 = jnp.pad(p1, ((0, 0), (0, prep["w1"].shape[0] - K1)))
    a1 = gemm_bias_relu(p1, prep["w1"], prep["b1"])              # (B*H1*W1, 128) bf16
    a1 = a1[:, :meta["c1_out"]].reshape(B, H1, W1, meta["c1_out"])

    # ---- conv2 + conv3 + linear1/2/3, fused (Pallas call #2) ---------------
    p2 = _im2col_nhwc(a1, k2, k2, s2)                            # (B,H2,W2,K2)
    _, H2, W2, K2 = p2.shape
    # The fused tail assumes conv3's kernel covers conv2's whole output
    # (conv3 spatial output == 1x1, true for the module's 36x36 geometry).
    # TODO(synk): generalize for conv3 outputs > 1x1 (e.g. 84x84 frames).
    assert (H2 - k3) // s3 + 1 == 1 and (W2 - k3) // s3 + 1 == 1

    Bp = _round_up(B, SUBLANE)
    # Rows ordered (spatial tap, padded batch) so the kernel's per-tap slices
    # are contiguous and sublane-aligned.
    p2 = jnp.transpose(p2, (1, 2, 0, 3)).reshape(H2 * W2, B, K2)
    p2 = jnp.pad(p2, ((0, 0), (0, Bp - B), (0, prep["w2"].shape[0] - K2)))
    p2 = p2.reshape(H2 * W2 * Bp, prep["w2"].shape[0])
    q = fused_tail(p2, prep, bpad=Bp)                            # (Bp, 128) f32
    return q[:B, :meta["num_actions"]]


# ----------------------------------------------------------------------------
# Pure-JAX f32 reference (correctness check)
# ----------------------------------------------------------------------------
def ref_forward(params, x):
    def conv(h, w, b, s):
        y = jax.lax.conv_general_dilated(
            h, w, (s, s), "VALID", dimension_numbers=("NCHW", "OIHW", "NCHW"))
        return jax.nn.relu(y + b[None, :, None, None])

    h = conv(x, params["c1_w"], params["c1_b"], 4)
    h = conv(h, params["c2_w"], params["c2_b"], 2)
    h = conv(h, params["c3_w"], params["c3_b"], 1)
    feat = h.reshape(h.shape[0], -1)
    z = jax.nn.relu(feat @ params["l1_w"].T + params["l1_b"])
    z = jax.nn.relu(z @ params["l2_w"].T + params["l2_b"])
    return z @ params["l3_w"].T + params["l3_b"]


# ----------------------------------------------------------------------------
# Deterministic synthetic parameters (shapes follow the module __init__)
# ----------------------------------------------------------------------------
def init_params(num_inputs, num_actions, hidden_size, fc_input_dim, init_w=0.3):
    """Bounds are roughly Glorot-scaled so activations stay O(1) and the
    bf16-vs-f32 comparison below is numerically meaningful (the module's
    real init_w=0.003 would make the output bias-dominated)."""
    key = jax.random.PRNGKey(0)
    ks = jax.random.split(key, 12)
    C = num_inputs[0]

    def u(k, shape, bound):
        return jax.random.uniform(k, shape, jnp.float32, -bound, bound)

    return {
        "c1_w": u(ks[0], (32, C, 8, 8), 0.10), "c1_b": u(ks[1], (32,), 0.10),
        "c2_w": u(ks[2], (64, 32, 4, 4), 0.08), "c2_b": u(ks[3], (64,), 0.08),
        "c3_w": u(ks[4], (64, 64, 3, 3), 0.07), "c3_b": u(ks[5], (64,), 0.07),
        "l1_w": u(ks[6], (hidden_size, fc_input_dim), 0.2),
        "l1_b": u(ks[7], (hidden_size,), 0.2),
        "l2_w": u(ks[8], (hidden_size, hidden_size), 0.3),
        "l2_b": u(ks[9], (hidden_size,), 0.3),
        "l3_w": u(ks[10], (num_actions, hidden_size), init_w),
        "l3_b": u(ks[11], (num_actions,), init_w),
    }


if __name__ == "__main__":
    # Shapes consistent with the module: NCHW input (B, C, 36, 36)
    #   conv1 (k8,s4): 36->8, conv2 (k4,s2): 8->3, conv3 (k3,s1): 3->1
    #   => fc_input_dim = 64 * 1 * 1 = 64
    batch, num_inputs, num_actions, hidden = 2, (4, 36, 36), 6, 32
    fc_input_dim = 64

    params = init_params(num_inputs, num_actions, hidden, fc_input_dim)
    prep, meta = prepare_params(params)
    x = jax.random.normal(jax.random.PRNGKey(0), (batch,) + num_inputs,
                          dtype=jnp.float32)

    fwd = jax.jit(functools.partial(conv_dqn_forward, meta=meta))
    out = fwd(prep, x)
    jax.block_until_ready(out)

    ref = ref_forward(params, x)
    assert out.shape == (batch, num_actions), out.shape
    # bf16 MXU operands with f32 accumulation: tolerance loosened vs all-f32.
    np.testing.assert_allclose(np.asarray(out), np.asarray(ref),
                               rtol=2e-2, atol=2e-2)
    print("KERNEL_OK")
</pallas_src>

<mosaic_0001>
module attributes {stable_mosaic.version = 11 : i64} {
  func.func @_gemm_bias_relu_kernel(%arg0: i32, %arg1: memref<128x256xbf16, #tpu.memory_space<vmem>>, %arg2: memref<256x128xbf16, #tpu.memory_space<vmem>>, %arg3: memref<1x128xf32, #tpu.memory_space<vmem>>, %arg4: memref<128x128xbf16, #tpu.memory_space<vmem>>) attributes {dimension_semantics = [#tpu.dimension_semantics<parallel>], iteration_bounds = array<i64: 1>, scalar_prefetch = 0 : i64, scratch_operands = 0 : i64, tpu.core_type = #tpu.core_type<tc>, window_params = [{transform_indices = @transform_0, window_bounds = array<i64: 128, 256>}, {pipeline_mode = #tpu.pipeline_mode<synchronous>, transform_indices = @transform_1, window_bounds = array<i64: 256, 128>}, {pipeline_mode = #tpu.pipeline_mode<synchronous>, transform_indices = @transform_2, window_bounds = array<i64: 1, 128>}, {transform_indices = @transform_3, window_bounds = array<i64: 128, 128>}]} {
    %c0 = arith.constant 0 : index
    %c0_0 = arith.constant 0 : index
    %0 = vector.load %arg1[%c0, %c0_0] : memref<128x256xbf16, #tpu.memory_space<vmem>>, vector<128x256xbf16>
    %c0_1 = arith.constant 0 : index
    %c0_2 = arith.constant 0 : index
    %1 = vector.load %arg2[%c0_1, %c0_2] : memref<256x128xbf16, #tpu.memory_space<vmem>>, vector<256x128xbf16>
    %cst = arith.constant dense<0.000000e+00> : vector<128x128xf32>
    %2 = tpu.matmul %0, %1, %cst {dimension_numbers = #tpu.dot_dimension_numbers<[1], [0], [0], [1], [0, 0, 1, 1], [], []>} : vector<128x256xbf16>, vector<256x128xbf16>, vector<128x128xf32> -> vector<128x128xf32>
    %c0_3 = arith.constant 0 : index
    %c0_4 = arith.constant 0 : index
    %3 = vector.load %arg3[%c0_3, %c0_4] : memref<1x128xf32, #tpu.memory_space<vmem>>, vector<1x128xf32>
    %4 = vector.broadcast %3 : vector<1x128xf32> to vector<128x128xf32>
    %5 = arith.addf %2, %4 : vector<128x128xf32>
    %cst_5 = arith.constant 0.000000e+00 : f32
    %6 = vector.broadcast %cst_5 : f32 to vector<128x128xf32>
    %7 = arith.maximumf %5, %6 : vector<128x128xf32>
    %8 = arith.truncf %7 : vector<128x128xf32> to vector<128x128xbf16>
    %c0_6 = arith.constant 0 : index
    %c0_7 = arith.constant 0 : index
    %9 = vector.load %arg4[%c0_6, %c0_7] : memref<128x128xbf16, #tpu.memory_space<vmem>>, vector<128x128xbf16>
    tpu.vector_store %arg4[%c0_6, %c0_7], %8 {strides = array<i32>} : memref<128x128xbf16, #tpu.memory_space<vmem>>, vector<128x128xbf16>,
    return
  }
  func.func @transform_0(%arg0: i32) -> (i32, i32) {
    %c0_i32 = arith.constant 0 : i32
    %c0_i32_0 = arith.constant 0 : i32
    return %arg0, %c0_i32 : i32, i32
  }
  func.func @transform_1(%arg0: i32) -> (i32, i32) {
    %c0_i32 = arith.constant 0 : i32
    %c0_i32_0 = arith.constant 0 : i32
    %c0_i32_1 = arith.constant 0 : i32
    return %c0_i32, %c0_i32_0 : i32, i32
  }
  func.func @transform_2(%arg0: i32) -> (i32, i32) {
    %c0_i32 = arith.constant 0 : i32
    %c0_i32_0 = arith.constant 0 : i32
    %c0_i32_1 = arith.constant 0 : i32
    return %c0_i32, %c0_i32_0 : i32, i32
  }
  func.func @transform_3(%arg0: i32) -> (i32, i32) {
    %c0_i32 = arith.constant 0 : i32
    %c0_i32_0 = arith.constant 0 : i32
    return %arg0, %c0_i32 : i32, i32
  }
}

module attributes {stable_mosaic.version = 11 : i64} {
  func.func @_fused_tail_kernel(%arg0: i32, %arg1: memref<72x512xbf16, #tpu.memory_space<vmem>>, %arg2: memref<512x128xbf16, #tpu.memory_space<vmem>>, %arg3: memref<1x128xf32, #tpu.memory_space<vmem>>, %arg4: memref<9x128x128xbf16, #tpu.memory_space<vmem>>, %arg5: memref<1x128xf32, #tpu.memory_space<vmem>>, %arg6: memref<128x128xbf16, #tpu.memory_space<vmem>>, %arg7: memref<1x128xf32, #tpu.memory_space<vmem>>, %arg8: memref<128x128xbf16, #tpu.memory_space<vmem>>, %arg9: memref<1x128xf32, #tpu.memory_space<vmem>>, %arg10: memref<128x128xbf16, #tpu.memory_space<vmem>>, %arg11: memref<1x128xf32, #tpu.memory_space<vmem>>, %arg12: memref<8x128xf32, #tpu.memory_space<vmem>>) attributes {dimension_semantics = [#tpu.dimension_semantics<arbitrary>], iteration_bounds = array<i64: 1>, scalar_prefetch = 0 : i64, scratch_operands = 0 : i64, tpu.core_type = #tpu.core_type<tc>, window_params = [{pipeline_mode = #tpu.pipeline_mode<synchronous>, transform_indices = @transform_0, window_bounds = array<i64: 72, 512>}, {pipeline_mode = #tpu.pipeline_mode<synchronous>, transform_indices = @transform_1, window_bounds = array<i64: 512, 128>}, {pipeline_mode = #tpu.pipeline_mode<synchronous>, transform_indices = @transform_2, window_bounds = array<i64: 1, 128>}, {pipeline_mode = #tpu.pipeline_mode<synchronous>, transform_indices = @transform_3, window_bounds = array<i64: 9, 128, 128>}, {pipeline_mode = #tpu.pipeline_mode<synchronous>, transform_indices = @transform_4, window_bounds = array<i64: 1, 128>}, {pipeline_mode = #tpu.pipeline_mode<synchronous>, transform_indices = @transform_5, window_bounds = array<i64: 128, 128>}, {pipeline_mode = #tpu.pipeline_mode<synchronous>, transform_indices = @transform_6, window_bounds = array<i64: 1, 128>}, {pipeline_mode = #tpu.pipeline_mode<synchronous>, transform_indices = @transform_7, window_bounds = array<i64: 128, 128>}, {pipeline_mode = #tpu.pipeline_mode<synchronous>, transform_indices = @transform_8, window_bounds = array<i64: 1, 128>}, {pipeline_mode = #tpu.pipeline_mode<synchronous>, transform_indices = @transform_9, window_bounds = array<i64: 128, 128>}, {pipeline_mode = #tpu.pipeline_mode<synchronous>, transform_indices = @transform_10, window_bounds = array<i64: 1, 128>}, {pipeline_mode = #tpu.pipeline_mode<synchronous>, transform_indices = @transform_11, window_bounds = array<i64: 8, 128>}]} {
    %c0 = arith.constant 0 : index
    %c0_0 = arith.constant 0 : index
    %0 = vector.load %arg1[%c0, %c0_0] : memref<72x512xbf16, #tpu.memory_space<vmem>>, vector<72x512xbf16>
    %c0_1 = arith.constant 0 : index
    %c0_2 = arith.constant 0 : index
    %1 = vector.load %arg2[%c0_1, %c0_2] : memref<512x128xbf16, #tpu.memory_space<vmem>>, vector<512x128xbf16>
    %cst = arith.constant dense<0.000000e+00> : vector<72x128xf32>
    %2 = tpu.matmul %0, %1, %cst {dimension_numbers = #tpu.dot_dimension_numbers<[1], [0], [0], [1], [0, 0, 1, 1], [], []>} : vector<72x512xbf16>, vector<512x128xbf16>, vector<72x128xf32> -> vector<72x128xf32>
    %c0_3 = arith.constant 0 : index
    %c0_4 = arith.constant 0 : index
    %3 = vector.load %arg3[%c0_3, %c0_4] : memref<1x128xf32, #tpu.memory_space<vmem>>, vector<1x128xf32>
    %4 = vector.broadcast %3 : vector<1x128xf32> to vector<72x128xf32>
    %5 = arith.addf %2, %4 : vector<72x128xf32>
    %cst_5 = arith.constant 0.000000e+00 : f32
    %6 = vector.broadcast %cst_5 : f32 to vector<72x128xf32>
    %7 = arith.maximumf %5, %6 : vector<72x128xf32>
    %cst_6 = arith.constant 0.000000e+00 : f32
    %8 = vector.broadcast %cst_6 : f32 to vector<8x128xf32>
    %9 = vector.extract_strided_slice %7 {offsets = [0, 0], sizes = [8, 128], strides = [1, 1]} : vector<72x128xf32> to vector<8x128xf32>
    %10 = arith.truncf %9 : vector<8x128xf32> to vector<8x128xbf16>
    %c0_7 = arith.constant 0 : index
    %c0_8 = arith.constant 0 : index
    %c0_9 = arith.constant 0 : index
    %11 = vector.load %arg4[%c0_7, %c0_8, %c0_9] : memref<9x128x128xbf16, #tpu.memory_space<vmem>>, vector<1x128x128xbf16>
    %12 = vector.shape_cast %11 : vector<1x128x128xbf16> to vector<128x128xbf16>
    %cst_10 = arith.constant dense<0.000000e+00> : vector<8x128xf32>
    %13 = tpu.matmul %10, %12, %cst_10 {dimension_numbers = #tpu.dot_dimension_numbers<[1], [0], [0], [1], [0, 0, 1, 1], [], []>} : vector<8x128xbf16>, vector<128x128xbf16>, vector<8x128xf32> -> vector<8x128xf32>
    %14 = arith.addf %8, %13 : vector<8x128xf32>
    %15 = vector.extract_strided_slice %7 {offsets = [8, 0], sizes = [8, 128], strides = [1, 1]} : vector<72x128xf32> to vector<8x128xf32>
    %16 = arith.truncf %15 : vector<8x128xf32> to vector<8x128xbf16>
    %c1 = arith.constant 1 : index
    %c0_11 = arith.constant 0 : index
    %c0_12 = arith.constant 0 : index
    %17 = vector.load %arg4[%c1, %c0_11, %c0_12] : memref<9x128x128xbf16, #tpu.memory_space<vmem>>, vector<1x128x128xbf16>
    %18 = vector.shape_cast %17 : vector<1x128x128xbf16> to vector<128x128xbf16>
    %cst_13 = arith.constant dense<0.000000e+00> : vector<8x128xf32>
    %19 = tpu.matmul %16, %18, %cst_13 {dimension_numbers = #tpu.dot_dimension_numbers<[1], [0], [0], [1], [0, 0, 1, 1], [], []>} : vector<8x128xbf16>, vector<128x128xbf16>, vector<8x128xf32> -> vector<8x128xf32>
    %20 = arith.addf %14, %19 : vector<8x128xf32>
    %21 = vector.extract_strided_slice %7 {offsets = [16, 0], sizes = [8, 128], strides = [1, 1]} : vector<72x128xf32> to vector<8x128xf32>
    %22 = arith.truncf %21 : vector<8x128xf32> to vector<8x128xbf16>
    %c2 = arith.constant 2 : index
    %c0_14 = arith.constant 0 : index
    %c0_15 = arith.constant 0 : index
    %23 = vector.load %arg4[%c2, %c0_14, %c0_15] : memref<9x128x128xbf16, #tpu.memory_space<vmem>>, vector<1x128x128xbf16>
    %24 = vector.shape_cast %23 : vector<1x128x128xbf16> to vector<128x128xbf16>
    %cst_16 = arith.constant dense<0.000000e+00> : vector<8x128xf32>
    %25 = tpu.matmul %22, %24, %cst_16 {dimension_numbers = #tpu.dot_dimension_numbers<[1], [0], [0], [1], [0, 0, 1, 1], [], []>} : vector<8x128xbf16>, vector<128x128xbf16>, vector<8x128xf32> -> vector<8x128xf32>
    %26 = arith.addf %20, %25 : vector<8x128xf32>
    %27 = vector.extract_strided_slice %7 {offsets = [24, 0], sizes = [8, 128], strides = [1, 1]} : vector<72x128xf32> to vector<8x128xf32>
    %28 = arith.truncf %27 : vector<8x128xf32> to vector<8x128xbf16>
    %c3 = arith.constant 3 : index
    %c0_17 = arith.constant 0 : index
    %c0_18 = arith.constant 0 : index
    %29 = vector.load %arg4[%c3, %c0_17, %c0_18] : memref<9x128x128xbf16, #tpu.memory_space<vmem>>, vector<1x128x128xbf16>
    %30 = vector.shape_cast %29 : vector<1x128x128xbf16> to vector<128x128xbf16>
    %cst_19 = arith.constant dense<0.000000e+00> : vector<8x128xf32>
    %31 = tpu.matmul %28, %30, %cst_19 {dimension_numbers = #tpu.dot_dimension_numbers<[1], [0], [0], [1], [0, 0, 1, 1], [], []>} : vector<8x128xbf16>, vector<128x128xbf16>, vector<8x128xf32> -> vector<8x128xf32>
    %32 = arith.addf %26, %31 : vector<8x128xf32>
    %33 = vector.extract_strided_slice %7 {offsets = [32, 0], sizes = [8, 128], strides = [1, 1]} : vector<72x128xf32> to vector<8x128xf32>
    %34 = arith.truncf %33 : vector<8x128xf32> to vector<8x128xbf16>
    %c4 = arith.constant 4 : index
    %c0_20 = arith.constant 0 : index
    %c0_21 = arith.constant 0 : index
    %35 = vector.load %arg4[%c4, %c0_20, %c0_21] : memref<9x128x128xbf16, #tpu.memory_space<vmem>>, vector<1x128x128xbf16>
    %36 = vector.shape_cast %35 : vector<1x128x128xbf16> to vector<128x128xbf16>
    %cst_22 = arith.constant dense<0.000000e+00> : vector<8x128xf32>
    %37 = tpu.matmul %34, %36, %cst_22 {dimension_numbers = #tpu.dot_dimension_numbers<[1], [0], [0], [1], [0, 0, 1, 1], [], []>} : vector<8x128xbf16>, vector<128x128xbf16>, vector<8x128xf32> -> vector<8x128xf32>
    %38 = arith.addf %32, %37 : vector<8x128xf32>
    %39 = vector.extract_strided_slice %7 {offsets = [40, 0], sizes = [8, 128], strides = [1, 1]} : vector<72x128xf32> to vector<8x128xf32>
    %40 = arith.truncf %39 : vector<8x128xf32> to vector<8x128xbf16>
    %c5 = arith.constant 5 : index
    %c0_23 = arith.constant 0 : index
    %c0_24 = arith.constant 0 : index
    %41 = vector.load %arg4[%c5, %c0_23, %c0_24] : memref<9x128x128xbf16, #tpu.memory_space<vmem>>, vector<1x128x128xbf16>
    %42 = vector.shape_cast %41 : vector<1x128x128xbf16> to vector<128x128xbf16>
    %cst_25 = arith.constant dense<0.000000e+00> : vector<8x128xf32>
    %43 = tpu.matmul %40, %42, %cst_25 {dimension_numbers = #tpu.dot_dimension_numbers<[1], [0], [0], [1], [0, 0, 1, 1], [], []>} : vector<8x128xbf16>, vector<128x128xbf16>, vector<8x128xf32> -> vector<8x128xf32>
    %44 = arith.addf %38, %43 : vector<8x128xf32>
    %45 = vector.extract_strided_slice %7 {offsets = [48, 0], sizes = [8, 128], strides = [1, 1]} : vector<72x128xf32> to vector<8x128xf32>
    %46 = arith.truncf %45 : vector<8x128xf32> to vector<8x128xbf16>
    %c6 = arith.constant 6 : index
    %c0_26 = arith.constant 0 : index
    %c0_27 = arith.constant 0 : index
    %47 = vector.load %arg4[%c6, %c0_26, %c0_27] : memref<9x128x128xbf16, #tpu.memory_space<vmem>>, vector<1x128x128xbf16>
    %48 = vector.shape_cast %47 : vector<1x128x128xbf16> to vector<128x128xbf16>
    %cst_28 = arith.constant dense<0.000000e+00> : vector<8x128xf32>
    %49 = tpu.matmul %46, %48, %cst_28 {dimension_numbers = #tpu.dot_dimension_numbers<[1], [0], [0], [1], [0, 0, 1, 1], [], []>} : vector<8x128xbf16>, vector<128x128xbf16>, vector<8x128xf32> -> vector<8x128xf32>
    %50 = arith.addf %44, %49 : vector<8x128xf32>
    %51 = vector.extract_strided_slice %7 {offsets = [56, 0], sizes = [8, 128], strides = [1, 1]} : vector<72x128xf32> to vector<8x128xf32>
    %52 = arith.truncf %51 : vector<8x128xf32> to vector<8x128xbf16>
    %c7 = arith.constant 7 : index
    %c0_29 = arith.constant 0 : index
    %c0_30 = arith.constant 0 : index
    %53 = vector.load %arg4[%c7, %c0_29, %c0_30] : memref<9x128x128xbf16, #tpu.memory_space<vmem>>, vector<1x128x128xbf16>
    %54 = vector.shape_cast %53 : vector<1x128x128xbf16> to vector<128x128xbf16>
    %cst_31 = arith.constant dense<0.000000e+00> : vector<8x128xf32>
    %55 = tpu.matmul %52, %54, %cst_31 {dimension_numbers = #tpu.dot_dimension_numbers<[1], [0], [0], [1], [0, 0, 1, 1], [], []>} : vector<8x128xbf16>, vector<128x128xbf16>, vector<8x128xf32> -> vector<8x128xf32>
    %56 = arith.addf %50, %55 : vector<8x128xf32>
    %57 = vector.extract_strided_slice %7 {offsets = [64, 0], sizes = [8, 128], strides = [1, 1]} : vector<72x128xf32> to vector<8x128xf32>
    %58 = arith.truncf %57 : vector<8x128xf32> to vector<8x128xbf16>
    %c8 = arith.constant 8 : index
    %c0_32 = arith.constant 0 : index
    %c0_33 = arith.constant 0 : index
    %59 = vector.load %arg4[%c8, %c0_32, %c0_33] : memref<9x128x128xbf16, #tpu.memory_space<vmem>>, vector<1x128x128xbf16>
    %60 = vector.shape_cast %59 : vector<1x128x128xbf16> to vector<128x128xbf16>
    %cst_34 = arith.constant dense<0.000000e+00> : vector<8x128xf32>
    %61 = tpu.matmul %58, %60, %cst_34 {dimension_numbers = #tpu.dot_dimension_numbers<[1], [0], [0], [1], [0, 0, 1, 1], [], []>} : vector<8x128xbf16>, vector<128x128xbf16>, vector<8x128xf32> -> vector<8x128xf32>
    %62 = arith.addf %56, %61 : vector<8x128xf32>
    %c0_35 = arith.constant 0 : index
    %c0_36 = arith.constant 0 : index
    %63 = vector.load %arg5[%c0_35, %c0_36] : memref<1x128xf32, #tpu.memory_space<vmem>>, vector<1x128xf32>
    %64 = vector.broadcast %63 : vector<1x128xf32> to vector<8x128xf32>
    %65 = arith.addf %62, %64 : vector<8x128xf32>
    %cst_37 = arith.constant 0.000000e+00 : f32
    %66 = vector.broadcast %cst_37 : f32 to vector<8x128xf32>
    %67 = arith.maximumf %65, %66 : vector<8x128xf32>
    %68 = arith.truncf %67 : vector<8x128xf32> to vector<8x128xbf16>
    %c0_38 = arith.constant 0 : index
    %c0_39 = arith.constant 0 : index
    %69 = vector.load %arg6[%c0_38, %c0_39] : memref<128x128xbf16, #tpu.memory_space<vmem>>, vector<128x128xbf16>
    %cst_40 = arith.constant dense<0.000000e+00> : vector<8x128xf32>
    %70 = tpu.matmul %68, %69, %cst_40 {dimension_numbers = #tpu.dot_dimension_numbers<[1], [0], [0], [1], [0, 0, 1, 1], [], []>} : vector<8x128xbf16>, vector<128x128xbf16>, vector<8x128xf32> -> vector<8x128xf32>
    %c0_41 = arith.constant 0 : index
    %c0_42 = arith.constant 0 : index
    %71 = vector.load %arg7[%c0_41, %c0_42] : memref<1x128xf32, #tpu.memory_space<vmem>>, vector<1x128xf32>
    %72 = vector.broadcast %71 : vector<1x128xf32> to vector<8x128xf32>
    %73 = arith.addf %70, %72 : vector<8x128xf32>
    %cst_43 = arith.constant 0.000000e+00 : f32
    %74 = vector.broadcast %cst_43 : f32 to vector<8x128xf32>
    %75 = arith.maximumf %73, %74 : vector<8x128xf32>
    %76 = arith.truncf %75 : vector<8x128xf32> to vector<8x128xbf16>
    %c0_44 = arith.constant 0 : index
    %c0_45 = arith.constant 0 : index
    %77 = vector.load %arg8[%c0_44, %c0_45] : memref<128x128xbf16, #tpu.memory_space<vmem>>, vector<128x128xbf16>
    %cst_46 = arith.constant dense<0.000000e+00> : vector<8x128xf32>
    %78 = tpu.matmul %76, %77, %cst_46 {dimension_numbers = #tpu.dot_dimension_numbers<[1], [0], [0], [1], [0, 0, 1, 1], [], []>} : vector<8x128xbf16>, vector<128x128xbf16>, vector<8x128xf32> -> vector<8x128xf32>
    %c0_47 = arith.constant 0 : index
    %c0_48 = arith.constant 0 : index
    %79 = vector.load %arg9[%c0_47, %c0_48] : memref<1x128xf32, #tpu.memory_space<vmem>>, vector<1x128xf32>
    %80 = vector.broadcast %79 : vector<1x128xf32> to vector<8x128xf32>
    %81 = arith.addf %78, %80 : vector<8x128xf32>
    %cst_49 = arith.constant 0.000000e+00 : f32
    %82 = vector.broadcast %cst_49 : f32 to vector<8x128xf32>
    %83 = arith.maximumf %81, %82 : vector<8x128xf32>
    %84 = arith.truncf %83 : vector<8x128xf32> to vector<8x128xbf16>
    %c0_50 = arith.constant 0 : index
    %c0_51 = arith.constant 0 : index
    %85 = vector.load %arg10[%c0_50, %c0_51] : memref<128x128xbf16, #tpu.memory_space<vmem>>, vector<128x128xbf16>
    %cst_52 = arith.constant dense<0.000000e+00> : vector<8x128xf32>
    %86 = tpu.matmul %84, %85, %cst_52 {dimension_numbers = #tpu.dot_dimension_numbers<[1], [0], [0], [1], [0, 0, 1, 1], [], []>} : vector<8x128xbf16>, vector<128x128xbf16>, vector<8x128xf32> -> vector<8x128xf32>
    %c0_53 = arith.constant 0 : index
    %c0_54 = arith.constant 0 : index
    %87 = vector.load %arg11[%c0_53, %c0_54] : memref<1x128xf32, #tpu.memory_space<vmem>>, vector<1x128xf32>
    %88 = vector.broadcast %87 : vector<1x128xf32> to vector<8x128xf32>
    %89 = arith.addf %86, %88 : vector<8x128xf32>
    %c0_55 = arith.constant 0 : index
    %c0_56 = arith.constant 0 : index
    %90 = vector.load %arg12[%c0_55, %c0_56] : memref<8x128xf32, #tpu.memory_space<vmem>>, vector<8x128xf32>
    tpu.vector_store %arg12[%c0_55, %c0_56], %89 {strides = array<i32>} : memref<8x128xf32, #tpu.memory_space<vmem>>, vector<8x128xf32>,
    return
  }
  func.func @transform_0(%arg0: i32) -> (i32, i32) {
    %c0_i32 = arith.constant 0 : i32
    %c0_i32_0 = arith.constant 0 : i32
    %c0_i32_1 = arith.constant 0 : i32
    return %c0_i32, %c0_i32_0 : i32, i32
  }
  func.func @transform_1(%arg0: i32) -> (i32, i32) {
    %c0_i32 = arith.constant 0 : i32
    %c0_i32_0 = arith.constant 0 : i32
    %c0_i32_1 = arith.constant 0 : i32
    return %c0_i32, %c0_i32_0 : i32, i32
  }
  func.func @transform_2(%arg0: i32) -> (i32, i32) {
    %c0_i32 = arith.constant 0 : i32
    %c0_i32_0 = arith.constant 0 : i32
    %c0_i32_1 = arith.constant 0 : i32
    return %c0_i32, %c0_i32_0 : i32, i32
  }
  func.func @transform_3(%arg0: i32) -> (i32, i32, i32) {
    %c0_i32 = arith.constant 0 : i32
    %c0_i32_0 = arith.constant 0 : i32
    %c0_i32_1 = arith.constant 0 : i32
    %c0_i32_2 = arith.constant 0 : i32
    return %c0_i32, %c0_i32_0, %c0_i32_1 : i32, i32, i32
  }
  func.func @transform_4(%arg0: i32) -> (i32, i32) {
    %c0_i32 = arith.constant 0 : i32
    %c0_i32_0 = arith.constant 0 : i32
    %c0_i32_1 = arith.constant 0 : i32
    return %c0_i32, %c0_i32_0 : i32, i32
  }
  func.func @transform_5(%arg0: i32) -> (i32, i32) {
    %c0_i32 = arith.constant 0 : i32
    %c0_i32_0 = arith.constant 0 : i32
    %c0_i32_1 = arith.constant 0 : i32
    return %c0_i32, %c0_i32_0 : i32, i32
  }
  func.func @transform_6(%arg0: i32) -> (i32, i32) {
    %c0_i32 = arith.constant 0 : i32
    %c0_i32_0 = arith.constant 0 : i32
    %c0_i32_1 = arith.constant 0 : i32
    return %c0_i32, %c0_i32_0 : i32, i32
  }
  func.func @transform_7(%arg0: i32) -> (i32, i32) {
    %c0_i32 = arith.constant 0 : i32
    %c0_i32_0 = arith.constant 0 : i32
    %c0_i32_1 = arith.constant 0 : i32
    return %c0_i32, %c0_i32_0 : i32, i32
  }
  func.func @transform_8(%arg0: i32) -> (i32, i32) {
    %c0_i32 = arith.constant 0 : i32
    %c0_i32_0 = arith.constant 0 : i32
    %c0_i32_1 = arith.constant 0 : i32
    return %c0_i32, %c0_i32_0 : i32, i32
  }
  func.func @transform_9(%arg0: i32) -> (i32, i32) {
    %c0_i32 = arith.constant 0 : i32
    %c0_i32_0 = arith.constant 0 : i32
    %c0_i32_1 = arith.constant 0 : i32
    return %c0_i32, %c0_i32_0 : i32, i32
  }
  func.func @transform_10(%arg0: i32) -> (i32, i32) {
    %c0_i32 = arith.constant 0 : i32
    %c0_i32_0 = arith.constant 0 : i32
    %c0_i32_1 = arith.constant 0 : i32
    return %c0_i32, %c0_i32_0 : i32, i32
  }
  func.func @transform_11(%arg0: i32) -> (i32, i32) {
    %c0_i32 = arith.constant 0 : i32
    %c0_i32_0 = arith.constant 0 : i32
    %c0_i32_1 = arith.constant 0 : i32
    return %c0_i32, %c0_i32_0 : i32, i32
  }
}

</mosaic_0001>

<llo_original>
// kernel: conv_dqn_forward.2
$region0: #{conv_dqn_forward.2}
  #allocation0 [shape = 'u32[]', space=smem, size = 0x4, offset = 0x4, fixed_abs, tag = 'smem constant byte address 0x4 - core index']
  #allocation1 [shape = 'u32[72,128]{1,0:T(1,128)}', space=vmem, size = 0x9000, scoped, tag = 'internal scratch']
  %s0 = inlined_call_operand.vmem [shape: bf16[128,256], index: 0, kind: input, shape index: {}]
  %s1 = inlined_call_operand.vmem [shape: bf16[256,128], index: 1, kind: input, shape index: {}]
  %s2 = inlined_call_operand.vmem [shape: f32[1,128], index: 2, kind: input, shape index: {}]
  %s3 = inlined_call_operand.vmem [shape: bf16[128,128], index: 3, kind: output, shape index: {}]
  %s4 = sld [smem:[#allocation0]]
  $region22: #{conv_dqn_forward.2} parent=0
    _
  %s6 = ssub.s32 1, %s4
  %s7 = scalar_select 0, %s6, %s4
  // Predicated region
  $region2: #{conv_dqn_forward.2} parent=0 // pred_check
    _
  $region3: #{conv_dqn_forward.2} parent=0 // pred_check_branch
    %9 = sbr.rel (0) target = $region5
  $region4: #{conv_dqn_forward.2} parent=0 // pred_region
    _
  $region5: #{conv_dqn_forward.2} parent=0 // pred_fallthru
    _
  // Predicated region
  $region6: #{conv_dqn_forward.2} parent=0 // pred_check
    _
  $region7: #{conv_dqn_forward.2} parent=0 // pred_check_branch
    %11 = sbr.rel (0) target = $region9
  $region8: #{conv_dqn_forward.2} parent=0 // pred_region
    _
  $region9: #{conv_dqn_forward.2} parent=0 // pred_fallthru
    _
  // Predicated region
  $region10: #{conv_dqn_forward.2} parent=0 // pred_check
    _
  $region11: #{conv_dqn_forward.2} parent=0 // pred_check_branch
    %13 = sbr.rel (0) target = $region13
  $region12: #{conv_dqn_forward.2} parent=0 // pred_region
    _
  $region13: #{conv_dqn_forward.2} parent=0 // pred_fallthru
    _
  %v14 = vld [vmem:[%s0] sm:$0xff]
  %v15 = vld [vmem:[%s0 + $0x8] sm:$0xff]
  %v16 = vld [vmem:[%s0 + $0x10] sm:$0xff]
  %v17 = vld [vmem:[%s0 + $0x18] sm:$0xff]
  %v18 = vld [vmem:[%s0 + $0x20] sm:$0xff]
  %v19 = vld [vmem:[%s0 + $0x28] sm:$0xff]
  %v20 = vld [vmem:[%s0 + $0x30] sm:$0xff]
  %v21 = vld [vmem:[%s0 + $0x38] sm:$0xff]
  %v22 = vld [vmem:[%s0 + $0x40] sm:$0xff]
  %v23 = vld [vmem:[%s0 + $0x48] sm:$0xff]
  %v24 = vld [vmem:[%s0 + $0x50] sm:$0xff]
  %v25 = vld [vmem:[%s0 + $0x58] sm:$0xff]
  %v26 = vld [vmem:[%s0 + $0x60] sm:$0xff]
  %v27 = vld [vmem:[%s0 + $0x68] sm:$0xff]
  %v28 = vld [vmem:[%s0 + $0x70] sm:$0xff]
  %v29 = vld [vmem:[%s0 + $0x78] sm:$0xff]
  %v30 = vld [vmem:[%s1] sm:$0xf]
  %v31 = vld [vmem:[%s1 + $0x4] sm:$0xf]
  %v32 = vld [vmem:[%s1 + $0x8] sm:$0xf]
  %v33 = vld [vmem:[%s1 + $0xc] sm:$0xf]
  %v34 = vld [vmem:[%s1 + $0x10] sm:$0xf]
  %v35 = vld [vmem:[%s1 + $0x14] sm:$0xf]
  %v36 = vld [vmem:[%s1 + $0x18] sm:$0xf]
  %v37 = vld [vmem:[%s1 + $0x1c] sm:$0xf]
  %v38 = vld [vmem:[%s1 + $0x20] sm:$0xf]
  %v39 = vld [vmem:[%s1 + $0x24] sm:$0xf]
  %v40 = vld [vmem:[%s1 + $0x28] sm:$0xf]
  %v41 = vld [vmem:[%s1 + $0x2c] sm:$0xf]
  %v42 = vld [vmem:[%s1 + $0x30] sm:$0xf]
  %v43 = vld [vmem:[%s1 + $0x34] sm:$0xf]
  %v44 = vld [vmem:[%s1 + $0x38] sm:$0xf]
  %v45 = vld [vmem:[%s1 + $0x3c] sm:$0xf]
  %v46 = vld [vmem:[%s1 + $0x40] sm:$0xf]
  %v47 = vld [vmem:[%s1 + $0x44] sm:$0xf]
  %v48 = vld [vmem:[%s1 + $0x48] sm:$0xf]
  %v49 = vld [vmem:[%s1 + $0x4c] sm:$0xf]
  %v50 = vld [vmem:[%s1 + $0x50] sm:$0xf]
  %v51 = vld [vmem:[%s1 + $0x54] sm:$0xf]
  %v52 = vld [vmem:[%s1 + $0x58] sm:$0xf]
  %v53 = vld [vmem:[%s1 + $0x5c] sm:$0xf]
  %v54 = vld [vmem:[%s1 + $0x60] sm:$0xf]
  %v55 = vld [vmem:[%s1 + $0x64] sm:$0xf]
  %v56 = vld [vmem:[%s1 + $0x68] sm:$0xf]
  %v57 = vld [vmem:[%s1 + $0x6c] sm:$0xf]
  %v58 = vld [vmem:[%s1 + $0x70] sm:$0xf]
  %v59 = vld [vmem:[%s1 + $0x74] sm:$0xf]
  %v60 = vld [vmem:[%s1 + $0x78] sm:$0xf]
  %v61 = vld [vmem:[%s1 + $0x7c] sm:$0xf]
  %v62 = vld [vmem:[%s2] sm:$0x1]
  %v64 = vperm.slane %v62, 0
  %v82 = vunpack.c.l.b16 %v14
  %v83 = vunpack.c.h.b16 %v14
  %v84 = vunpack.c.l.b16 %v15
  %v85 = vunpack.c.h.b16 %v15
  %v86 = vunpack.c.l.b16 %v16
  %v87 = vunpack.c.h.b16 %v16
  %v88 = vunpack.c.l.b16 %v17
  %v89 = vunpack.c.h.b16 %v17
  %v90 = vunpack.c.l.b16 %v18
  %v91 = vunpack.c.h.b16 %v18
  %v92 = vunpack.c.l.b16 %v19
  %v93 = vunpack.c.h.b16 %v19
  %v94 = vunpack.c.l.b16 %v20
  %v95 = vunpack.c.h.b16 %v20
  %v96 = vunpack.c.l.b16 %v21
  %v97 = vunpack.c.h.b16 %v21
  %v98 = vunpack.c.l.b16 %v22
  %v99 = vunpack.c.h.b16 %v22
  %v100 = vunpack.c.l.b16 %v23
  %v101 = vunpack.c.h.b16 %v23
  %v102 = vunpack.c.l.b16 %v24
  %v103 = vunpack.c.h.b16 %v24
  %v104 = vunpack.c.l.b16 %v25
  %v105 = vunpack.c.h.b16 %v25
  %v106 = vunpack.c.l.b16 %v26
  %v107 = vunpack.c.h.b16 %v26
  %v108 = vunpack.c.l.b16 %v27
  %v109 = vunpack.c.h.b16 %v27
  %v110 = vunpack.c.l.b16 %v28
  %v111 = vunpack.c.h.b16 %v28
  %v112 = vunpack.c.l.b16 %v29
  %v113 = vunpack.c.h.b16 %v29
  %v114 = vpack.c.b16 %v84, %v82
  %v115 = vpack.c.b16 %v85, %v83
  %v116 = vpack.c.b16 %v88, %v86
  %v117 = vpack.c.b16 %v89, %v87
  %v118 = vpack.c.b16 %v92, %v90
  %v119 = vpack.c.b16 %v93, %v91
  %v120 = vpack.c.b16 %v96, %v94
  %v121 = vpack.c.b16 %v97, %v95
  %v122 = vpack.c.b16 %v100, %v98
  %v123 = vpack.c.b16 %v101, %v99
  %v124 = vpack.c.b16 %v104, %v102
  %v125 = vpack.c.b16 %v105, %v103
  %v126 = vpack.c.b16 %v108, %v106
  %v127 = vpack.c.b16 %v109, %v107
  %v128 = vpack.c.b16 %v112, %v110
  %v129 = vpack.c.b16 %v113, %v111
  %v178 = vunpack.c.l.b16 %v30
  %v179 = vunpack.c.l.b16 %v31
  %v180 = vunpack.c.l.b16 %v32
  %v181 = vunpack.c.l.b16 %v33
  %v182 = vunpack.c.l.b16 %v34
  %v183 = vunpack.c.l.b16 %v35
  %v184 = vunpack.c.l.b16 %v36
  %v185 = vunpack.c.l.b16 %v37
  %v186 = vunpack.c.l.b16 %v38
  %v187 = vunpack.c.l.b16 %v39
  %v188 = vunpack.c.l.b16 %v40
  %v189 = vunpack.c.l.b16 %v41
  %v190 = vunpack.c.l.b16 %v42
  %v191 = vunpack.c.l.b16 %v43
  %v192 = vunpack.c.l.b16 %v44
  %v193 = vunpack.c.l.b16 %v45
  %v194 = vunpack.c.l.b16 %v46
  %v195 = vunpack.c.l.b16 %v47
  %v196 = vunpack.c.l.b16 %v48
  %v197 = vunpack.c.l.b16 %v49
  %v198 = vunpack.c.l.b16 %v50
  %v199 = vunpack.c.l.b16 %v51
  %v200 = vunpack.c.l.b16 %v52
  %v201 = vunpack.c.l.b16 %v53
  %v202 = vunpack.c.l.b16 %v54
  %v203 = vunpack.c.l.b16 %v55
  %v204 = vunpack.c.l.b16 %v56
  %v205 = vunpack.c.l.b16 %v57
  %v206 = vunpack.c.l.b16 %v58
  %v207 = vunpack.c.l.b16 %v59
  %v208 = vunpack.c.l.b16 %v60
  %v209 = vunpack.c.l.b16 %v61
  %v210 = vpack.c.b16 %v179, %v178
  %v211 = vpack.c.b16 %v181, %v180
  %v212 = vpack.c.b16 %v183, %v182
  %v213 = vpack.c.b16 %v185, %v184
  %v214 = vpack.c.b16 %v187, %v186
  %v215 = vpack.c.b16 %v189, %v188
  %v216 = vpack.c.b16 %v191, %v190
  %v217 = vpack.c.b16 %v193, %v192
  %v218 = vpack.c.b16 %v195, %v194
  %v219 = vpack.c.b16 %v197, %v196
  %v220 = vpack.c.b16 %v199, %v198
  %v221 = vpack.c.b16 %v201, %v200
  %v222 = vpack.c.b16 %v203, %v202
  %v223 = vpack.c.b16 %v205, %v204
  %v224 = vpack.c.b16 %v207, %v206
  %v225 = vpack.c.b16 %v209, %v208
  %242 = vmatpush.bf16.msra.mxu0 %v217
  %243 = vmatpush.bf16.msra.mxu0 %v216
  %244 = vmatpush.bf16.msra.mxu0 %v215
  %245 = vmatpush.bf16.msra.mxu0 %v214
  %246 = vmatpush.bf16.msra.mxu0 %v213
  %247 = vmatpush.bf16.msra.mxu0 %v212
  %248 = vmatpush.bf16.msra.mxu0 %v211
  %249 = vmatpush.bf16.msra.mxu0 %v210
  %250 = vmatmul.bf16.gmra.mxu0 %v114
  %v251 = vpop.f32.mrf.mxu0
  %v252 = vadd.f32 %v64, %v251
  %v253 = vpop.f32.mrf.mxu0
  %v254 = vadd.f32 %v64, %v253
  %255 = vmatmul.bf16.gmra.mxu0 %v116
  %v256 = vpop.f32.mrf.mxu0
  %v257 = vadd.f32 %v64, %v256
  %v258 = vpop.f32.mrf.mxu0
  %v259 = vadd.f32 %v64, %v258
  %260 = vmatmul.bf16.gmra.mxu0 %v118
  %v261 = vpop.f32.mrf.mxu0
  %v262 = vadd.f32 %v64, %v261
  %v263 = vpop.f32.mrf.mxu0
  %v264 = vadd.f32 %v64, %v263
  %265 = vmatmul.bf16.gmra.mxu0 %v120
  %v266 = vpop.f32.mrf.mxu0
  %v267 = vadd.f32 %v64, %v266
  %v268 = vpop.f32.mrf.mxu0
  %v269 = vadd.f32 %v64, %v268
  %270 = vmatmul.bf16.gmra.mxu0 %v122
  %v271 = vpop.f32.mrf.mxu0
  %v272 = vadd.f32 %v64, %v271
  %v273 = vpop.f32.mrf.mxu0
  %v274 = vadd.f32 %v64, %v273
  %275 = vmatmul.bf16.gmra.mxu0 %v124
  %v276 = vpop.f32.mrf.mxu0
  %v277 = vadd.f32 %v64, %v276
  %v278 = vpop.f32.mrf.mxu0
  %v279 = vadd.f32 %v64, %v278
  %280 = vmatmul.bf16.gmra.mxu0 %v126
  %v281 = vpop.f32.mrf.mxu0
  %v282 = vadd.f32 %v64, %v281
  %v283 = vpop.f32.mrf.mxu0
  %v284 = vadd.f32 %v64, %v283
  %285 = vmatmul.bf16.gmra.mxu0 %v128
  %v286 = vpop.f32.mrf.mxu0
  %v287 = vadd.f32 %v64, %v286
  %v288 = vpop.f32.mrf.mxu0
  %v289 = vadd.f32 %v64, %v288
  %290 = vdwg.mxu0
  %291 = vmatpush.bf16.msra.mxu0 %v225
  %292 = vmatpush.bf16.msra.mxu0 %v224
  %293 = vmatpush.bf16.msra.mxu0 %v223
  %294 = vmatpush.bf16.msra.mxu0 %v222
  %295 = vmatpush.bf16.msra.mxu0 %v221
  %296 = vmatpush.bf16.msra.mxu0 %v220
  %297 = vmatpush.bf16.msra.mxu0 %v219
  %298 = vmatpush.bf16.msra.mxu0 %v218
  %299 = vmatmul.bf16.gmra.mxu0 %v115
  %v300 = vpop.f32.mrf.mxu0
  %v301 = vadd.f32 %v252, %v300
  %v302 = vpop.f32.mrf.mxu0
  %v303 = vadd.f32 %v254, %v302
  %304 = vmatmul.bf16.gmra.mxu0 %v117
  %v305 = vpop.f32.mrf.mxu0
  %v306 = vadd.f32 %v257, %v305
  %v307 = vpop.f32.mrf.mxu0
  %v308 = vadd.f32 %v259, %v307
  %309 = vmatmul.bf16.gmra.mxu0 %v119
  %v310 = vpop.f32.mrf.mxu0
  %v311 = vadd.f32 %v262, %v310
  %v312 = vpop.f32.mrf.mxu0
  %v313 = vadd.f32 %v264, %v312
  %314 = vmatmul.bf16.gmra.mxu0 %v121
  %v315 = vpop.f32.mrf.mxu0
  %v316 = vadd.f32 %v267, %v315
  %v317 = vpop.f32.mrf.mxu0
  %v318 = vadd.f32 %v269, %v317
  %319 = vmatmul.bf16.gmra.mxu0 %v123
  %v320 = vpop.f32.mrf.mxu0
  %v321 = vadd.f32 %v272, %v320
  %v322 = vpop.f32.mrf.mxu0
  %v323 = vadd.f32 %v274, %v322
  %324 = vmatmul.bf16.gmra.mxu0 %v125
  %v325 = vpop.f32.mrf.mxu0
  %v326 = vadd.f32 %v277, %v325
  %v327 = vpop.f32.mrf.mxu0
  %v328 = vadd.f32 %v279, %v327
  %329 = vmatmul.bf16.gmra.mxu0 %v127
  %v330 = vpop.f32.mrf.mxu0
  %v331 = vadd.f32 %v282, %v330
  %v332 = vpop.f32.mrf.mxu0
  %v333 = vadd.f32 %v284, %v332
  %334 = vmatmul.bf16.gmra.mxu0 %v129
  %v335 = vpop.f32.mrf.mxu0
  %v336 = vadd.f32 %v287, %v335
  %v337 = vpop.f32.mrf.mxu0
  %v338 = vadd.f32 %v289, %v337
  %339 = vdwg.mxu0
  %v340 = vmax.f32 %v301, 0.0
  %v341 = vmax.f32 %v303, 0.0
  %v342 = vmax.f32 %v306, 0.0
  %v343 = vmax.f32 %v308, 0.0
  %v344 = vmax.f32 %v311, 0.0
  %v345 = vmax.f32 %v313, 0.0
  %v346 = vmax.f32 %v316, 0.0
  %v347 = vmax.f32 %v318, 0.0
  %v348 = vmax.f32 %v321, 0.0
  %v349 = vmax.f32 %v323, 0.0
  %v350 = vmax.f32 %v326, 0.0
  %v351 = vmax.f32 %v328, 0.0
  %v352 = vmax.f32 %v331, 0.0
  %v353 = vmax.f32 %v333, 0.0
  %v354 = vmax.f32 %v336, 0.0
  %v355 = vmax.f32 %v338, 0.0
  %v356 = vpack.c.bf16 %v340, %v340
  %v357 = vpack.c.bf16 %v341, %v341
  %v358 = vpack.c.bf16 %v342, %v342
  %v359 = vpack.c.bf16 %v343, %v343
  %v360 = vpack.c.bf16 %v344, %v344
  %v361 = vpack.c.bf16 %v345, %v345
  %v362 = vpack.c.bf16 %v346, %v346
  %v363 = vpack.c.bf16 %v347, %v347
  %v364 = vpack.c.bf16 %v348, %v348
  %v365 = vpack.c.bf16 %v349, %v349
  %v366 = vpack.c.bf16 %v350, %v350
  %v367 = vpack.c.bf16 %v351, %v351
  %v368 = vpack.c.bf16 %v352, %v352
  %v369 = vpack.c.bf16 %v353, %v353
  %v370 = vpack.c.bf16 %v354, %v354
  %v371 = vpack.c.bf16 %v355, %v355
  %372 = vst [vmem:[%s3] sm:$0xf] %v356
  %373 = vst [vmem:[%s3 + $0x4] sm:$0xf] %v357
  %374 = vst [vmem:[%s3 + $0x8] sm:$0xf] %v358
  %375 = vst [vmem:[%s3 + $0xc] sm:$0xf] %v359
  %376 = vst [vmem:[%s3 + $0x10] sm:$0xf] %v360
  %377 = vst [vmem:[%s3 + $0x14] sm:$0xf] %v361
  %378 = vst [vmem:[%s3 + $0x18] sm:$0xf] %v362
  %379 = vst [vmem:[%s3 + $0x1c] sm:$0xf] %v363
  %380 = vst [vmem:[%s3 + $0x20] sm:$0xf] %v364
  %381 = vst [vmem:[%s3 + $0x24] sm:$0xf] %v365
  %382 = vst [vmem:[%s3 + $0x28] sm:$0xf] %v366
  %383 = vst [vmem:[%s3 + $0x2c] sm:$0xf] %v367
  %384 = vst [vmem:[%s3 + $0x30] sm:$0xf] %v368
  %385 = vst [vmem:[%s3 + $0x34] sm:$0xf] %v369
  %386 = vst [vmem:[%s3 + $0x38] sm:$0xf] %v370
  %387 = vst [vmem:[%s3 + $0x3c] sm:$0xf] %v371
  // Predicated region
  $region14: #{conv_dqn_forward.2} parent=0 // pred_check
    _
  $region15: #{conv_dqn_forward.2} parent=0 // pred_check_branch
    %389 = sbr.rel (0) target = $region17
  $region16: #{conv_dqn_forward.2} parent=0 // pred_region
    _
  $region17: #{conv_dqn_forward.2} parent=0 // pred_fallthru
    _
  // Predicated region
  $region18: #{conv_dqn_forward.2} parent=0 // pred_check
    _
  $region19: #{conv_dqn_forward.2} parent=0 // pred_check_branch
    %391 = sbr.rel (0) target = $region21
  $region20: #{conv_dqn_forward.2} parent=0 // pred_region
    _
  $region21: #{conv_dqn_forward.2} parent=0 // pred_fallthru
    _

// kernel: conv_dqn_forward.3
$region0: #{conv_dqn_forward.3}
  #allocation0 [shape = 'u32[]', space=smem, size = 0x4, offset = 0x4, fixed_abs, tag = 'smem constant byte address 0x4 - core index']
  #allocation1 [shape = 'u32[72,128]{1,0:T(1,128)}', space=vmem, size = 0x9000, scoped, tag = 'internal scratch']
  %s0 = inlined_call_operand.vmem [shape: bf16[72,512], index: 0, kind: input, shape index: {}]
  %s1 = inlined_call_operand.vmem [shape: bf16[512,128], index: 1, kind: input, shape index: {}]
  %s2 = inlined_call_operand.vmem [shape: f32[1,128], index: 2, kind: input, shape index: {}]
  %s3 = inlined_call_operand.vmem [shape: bf16[9,128,128], index: 3, kind: input, shape index: {}]
  %s4 = inlined_call_operand.vmem [shape: f32[1,128], index: 4, kind: input, shape index: {}]
  %s5 = inlined_call_operand.vmem [shape: bf16[128,128], index: 5, kind: input, shape index: {}]
  %s6 = inlined_call_operand.vmem [shape: f32[1,128], index: 6, kind: input, shape index: {}]
  %s7 = inlined_call_operand.vmem [shape: bf16[128,128], index: 7, kind: input, shape index: {}]
  %s8 = inlined_call_operand.vmem [shape: f32[1,128], index: 8, kind: input, shape index: {}]
  %s9 = inlined_call_operand.vmem [shape: bf16[128,128], index: 9, kind: input, shape index: {}]
  %s10 = inlined_call_operand.vmem [shape: f32[1,128], index: 10, kind: input, shape index: {}]
  %s11 = inlined_call_operand.vmem [shape: f32[8,128], index: 11, kind: output, shape index: {}]
  %s12 = sld [smem:[#allocation0]]
  $region54: #{conv_dqn_forward.3} parent=0
    _
  %s14 = ssub.s32 1, %s12
  %s15 = scalar_select 0, %s14, %s12
  // Predicated region
  $region2: #{conv_dqn_forward.3} parent=0 // pred_check
    _
  $region3: #{conv_dqn_forward.3} parent=0 // pred_check_branch
    %17 = sbr.rel (0) target = $region5
  $region4: #{conv_dqn_forward.3} parent=0 // pred_region
    _
  $region5: #{conv_dqn_forward.3} parent=0 // pred_fallthru
    _
  // Predicated region
  $region6: #{conv_dqn_forward.3} parent=0 // pred_check
    _
  $region7: #{conv_dqn_forward.3} parent=0 // pred_check_branch
    %19 = sbr.rel (0) target = $region9
  $region8: #{conv_dqn_forward.3} parent=0 // pred_region
    _
  $region9: #{conv_dqn_forward.3} parent=0 // pred_fallthru
    _
  // Predicated region
  $region10: #{conv_dqn_forward.3} parent=0 // pred_check
    _
  $region11: #{conv_dqn_forward.3} parent=0 // pred_check_branch
    %21 = sbr.rel (0) target = $region13
  $region12: #{conv_dqn_forward.3} parent=0 // pred_region
    _
  $region13: #{conv_dqn_forward.3} parent=0 // pred_fallthru
    _
  // Predicated region
  $region14: #{conv_dqn_forward.3} parent=0 // pred_check
    _
  $region15: #{conv_dqn_forward.3} parent=0 // pred_check_branch
    %23 = sbr.rel (0) target = $region17
  $region16: #{conv_dqn_forward.3} parent=0 // pred_region
    _
  $region17: #{conv_dqn_forward.3} parent=0 // pred_fallthru
    _
  // Predicated region
  $region18: #{conv_dqn_forward.3} parent=0 // pred_check
    _
  $region19: #{conv_dqn_forward.3} parent=0 // pred_check_branch
    %25 = sbr.rel (0) target = $region21
  $region20: #{conv_dqn_forward.3} parent=0 // pred_region
    _
  $region21: #{conv_dqn_forward.3} parent=0 // pred_fallthru
    _
  // Predicated region
  $region22: #{conv_dqn_forward.3} parent=0 // pred_check
    _
  $region23: #{conv_dqn_forward.3} parent=0 // pred_check_branch
    %27 = sbr.rel (0) target = $region25
  $region24: #{conv_dqn_forward.3} parent=0 // pred_region
    _
  $region25: #{conv_dqn_forward.3} parent=0 // pred_fallthru
    _
  // Predicated region
  $region26: #{conv_dqn_forward.3} parent=0 // pred_check
    _
  $region27: #{conv_dqn_forward.3} parent=0 // pred_check_branch
    %29 = sbr.rel (0) target = $region29
  $region28: #{conv_dqn_forward.3} parent=0 // pred_region
    _
  $region29: #{conv_dqn_forward.3} parent=0 // pred_fallthru
    _
  // Predicated region
  $region30: #{conv_dqn_forward.3} parent=0 // pred_check
    _
  $region31: #{conv_dqn_forward.3} parent=0 // pred_check_branch
    %31 = sbr.rel (0) target = $region33
  $region32: #{conv_dqn_forward.3} parent=0 // pred_region
    _
  $region33: #{conv_dqn_forward.3} parent=0 // pred_fallthru
    _
  // Predicated region
  $region34: #{conv_dqn_forward.3} parent=0 // pred_check
    _
  $region35: #{conv_dqn_forward.3} parent=0 // pred_check_branch
    %33 = sbr.rel (0) target = $region37
  $region36: #{conv_dqn_forward.3} parent=0 // pred_region
    _
  $region37: #{conv_dqn_forward.3} parent=0 // pred_fallthru
    _
  // Predicated region
  $region38: #{conv_dqn_forward.3} parent=0 // pred_check
    _
  $region39: #{conv_dqn_forward.3} parent=0 // pred_check_branch
    %35 = sbr.rel (0) target = $region41
  $region40: #{conv_dqn_forward.3} parent=0 // pred_region
    _
  $region41: #{conv_dqn_forward.3} parent=0 // pred_fallthru
    _
  // Predicated region
  $region42: #{conv_dqn_forward.3} parent=0 // pred_check
    _
  $region43: #{conv_dqn_forward.3} parent=0 // pred_check_branch
    %37 = sbr.rel (0) target = $region45
  $region44: #{conv_dqn_forward.3} parent=0 // pred_region
    _
  $region45: #{conv_dqn_forward.3} parent=0 // pred_fallthru
    _
  %v38 = vld [vmem:[%s0] sm:$0xff]
  %v39 = vld [vmem:[%s0 + $0x8] sm:$0xff]
  %v40 = vld [vmem:[%s0 + $0x10] sm:$0xff]
  %v41 = vld [vmem:[%s0 + $0x18] sm:$0xff]
  %v42 = vld [vmem:[%s0 + $0x20] sm:$0xff]
  %v43 = vld [vmem:[%s0 + $0x28] sm:$0xff]
  %v44 = vld [vmem:[%s0 + $0x30] sm:$0xff]
  %v45 = vld [vmem:[%s0 + $0x38] sm:$0xff]
  %v46 = vld [vmem:[%s0 + $0x40] sm:$0xff]
  %v47 = vld [vmem:[%s0 + $0x48] sm:$0xff]
  %v48 = vld [vmem:[%s0 + $0x50] sm:$0xff]
  %v49 = vld [vmem:[%s0 + $0x58] sm:$0xff]
  %v50 = vld [vmem:[%s0 + $0x60] sm:$0xff]
  %v51 = vld [vmem:[%s0 + $0x68] sm:$0xff]
  %v52 = vld [vmem:[%s0 + $0x70] sm:$0xff]
  %v53 = vld [vmem:[%s0 + $0x78] sm:$0xff]
  %v54 = vld [vmem:[%s0 + $0x80] sm:$0xff]
  %v55 = vld [vmem:[%s0 + $0x88] sm:$0xff]
  %v56 = vld [vmem:[%s1] sm:$0xf]
  %v57 = vld [vmem:[%s1 + $0x4] sm:$0xf]
  %v58 = vld [vmem:[%s1 + $0x8] sm:$0xf]
  %v59 = vld [vmem:[%s1 + $0xc] sm:$0xf]
  %v60 = vld [vmem:[%s1 + $0x10] sm:$0xf]
  %v61 = vld [vmem:[%s1 + $0x14] sm:$0xf]
  %v62 = vld [vmem:[%s1 + $0x18] sm:$0xf]
  %v63 = vld [vmem:[%s1 + $0x1c] sm:$0xf]
  %v64 = vld [vmem:[%s1 + $0x20] sm:$0xf]
  %v65 = vld [vmem:[%s1 + $0x24] sm:$0xf]
  %v66 = vld [vmem:[%s1 + $0x28] sm:$0xf]
  %v67 = vld [vmem:[%s1 + $0x2c] sm:$0xf]
  %v68 = vld [vmem:[%s1 + $0x30] sm:$0xf]
  %v69 = vld [vmem:[%s1 + $0x34] sm:$0xf]
  %v70 = vld [vmem:[%s1 + $0x38] sm:$0xf]
  %v71 = vld [vmem:[%s1 + $0x3c] sm:$0xf]
  %v72 = vld [vmem:[%s1 + $0x40] sm:$0xf]
  %v73 = vld [vmem:[%s1 + $0x44] sm:$0xf]
  %v74 = vld [vmem:[%s1 + $0x48] sm:$0xf]
  %v75 = vld [vmem:[%s1 + $0x4c] sm:$0xf]
  %v76 = vld [vmem:[%s1 + $0x50] sm:$0xf]
  %v77 = vld [vmem:[%s1 + $0x54] sm:$0xf]
  %v78 = vld [vmem:[%s1 + $0x58] sm:$0xf]
  %v79 = vld [vmem:[%s1 + $0x5c] sm:$0xf]
  %v80 = vld [vmem:[%s1 + $0x60] sm:$0xf]
  %v81 = vld [vmem:[%s1 + $0x64] sm:$0xf]
  %v82 = vld [vmem:[%s1 + $0x68] sm:$0xf]
  %v83 = vld [vmem:[%s1 + $0x6c] sm:$0xf]
  %v84 = vld [vmem:[%s1 + $0x70] sm:$0xf]
  %v85 = vld [vmem:[%s1 + $0x74] sm:$0xf]
  %v86 = vld [vmem:[%s1 + $0x78] sm:$0xf]
  %v87 = vld [vmem:[%s1 + $0x7c] sm:$0xf]
  %v88 = vld [vmem:[%s1 + $0x80] sm:$0xf]
  %v89 = vld [vmem:[%s1 + $0x84] sm:$0xf]
  %v90 = vld [vmem:[%s1 + $0x88] sm:$0xf]
  %v91 = vld [vmem:[%s1 + $0x8c] sm:$0xf]
  %v92 = vld [vmem:[%s1 + $0x90] sm:$0xf]
  %v93 = vld [vmem:[%s1 + $0x94] sm:$0xf]
  %v94 = vld [vmem:[%s1 + $0x98] sm:$0xf]
  %v95 = vld [vmem:[%s1 + $0x9c] sm:$0xf]
  %v96 = vld [vmem:[%s1 + $0xa0] sm:$0xf]
  %v97 = vld [vmem:[%s1 + $0xa4] sm:$0xf]
  %v98 = vld [vmem:[%s1 + $0xa8] sm:$0xf]
  %v99 = vld [vmem:[%s1 + $0xac] sm:$0xf]
  %v100 = vld [vmem:[%s1 + $0xb0] sm:$0xf]
  %v101 = vld [vmem:[%s1 + $0xb4] sm:$0xf]
  %v102 = vld [vmem:[%s1 + $0xb8] sm:$0xf]
  %v103 = vld [vmem:[%s1 + $0xbc] sm:$0xf]
  %v104 = vld [vmem:[%s1 + $0xc0] sm:$0xf]
  %v105 = vld [vmem:[%s1 + $0xc4] sm:$0xf]
  %v106 = vld [vmem:[%s1 + $0xc8] sm:$0xf]
  %v107 = vld [vmem:[%s1 + $0xcc] sm:$0xf]
  %v108 = vld [vmem:[%s1 + $0xd0] sm:$0xf]
  %v109 = vld [vmem:[%s1 + $0xd4] sm:$0xf]
  %v110 = vld [vmem:[%s1 + $0xd8] sm:$0xf]
  %v111 = vld [vmem:[%s1 + $0xdc] sm:$0xf]
  %v112 = vld [vmem:[%s1 + $0xe0] sm:$0xf]
  %v113 = vld [vmem:[%s1 + $0xe4] sm:$0xf]
  %v114 = vld [vmem:[%s1 + $0xe8] sm:$0xf]
  %v115 = vld [vmem:[%s1 + $0xec] sm:$0xf]
  %v116 = vld [vmem:[%s1 + $0xf0] sm:$0xf]
  %v117 = vld [vmem:[%s1 + $0xf4] sm:$0xf]
  %v118 = vld [vmem:[%s1 + $0xf8] sm:$0xf]
  %v119 = vld [vmem:[%s1 + $0xfc] sm:$0xf]
  %v120 = vld [vmem:[%s2] sm:$0x1]
  %v122 = vperm.slane %v120, 0
  %v142 = vunpack.c.l.b16 %v38
  %v143 = vunpack.c.h.b16 %v38
  %v144 = vunpack.c.l.b16 %v39
  %v145 = vunpack.c.h.b16 %v39
  %v146 = vunpack.c.l.b16 %v40
  %v147 = vunpack.c.h.b16 %v40
  %v148 = vunpack.c.l.b16 %v41
  %v149 = vunpack.c.h.b16 %v41
  %v150 = vunpack.c.l.b16 %v42
  %v151 = vunpack.c.h.b16 %v42
  %v152 = vunpack.c.l.b16 %v43
  %v153 = vunpack.c.h.b16 %v43
  %v154 = vunpack.c.l.b16 %v44
  %v155 = vunpack.c.h.b16 %v44
  %v156 = vunpack.c.l.b16 %v45
  %v157 = vunpack.c.h.b16 %v45
  %v158 = vunpack.c.l.b16 %v46
  %v159 = vunpack.c.h.b16 %v46
  %v160 = vunpack.c.l.b16 %v47
  %v161 = vunpack.c.h.b16 %v47
  %v162 = vunpack.c.l.b16 %v48
  %v163 = vunpack.c.h.b16 %v48
  %v164 = vunpack.c.l.b16 %v49
  %v165 = vunpack.c.h.b16 %v49
  %v166 = vunpack.c.l.b16 %v50
  %v167 = vunpack.c.h.b16 %v50
  %v168 = vunpack.c.l.b16 %v51
  %v169 = vunpack.c.h.b16 %v51
  %v170 = vunpack.c.l.b16 %v52
  %v171 = vunpack.c.h.b16 %v52
  %v172 = vunpack.c.l.b16 %v53
  %v173 = vunpack.c.h.b16 %v53
  %v174 = vunpack.c.l.b16 %v54
  %v175 = vunpack.c.h.b16 %v54
  %v176 = vunpack.c.l.b16 %v55
  %v177 = vunpack.c.h.b16 %v55
  %v178 = vpack.c.b16 %v146, %v142
  %v179 = vpack.c.b16 %v147, %v143
  %v180 = vpack.c.b16 %v148, %v144
  %v181 = vpack.c.b16 %v149, %v145
  %v182 = vpack.c.b16 %v154, %v150
  %v183 = vpack.c.b16 %v155, %v151
  %v184 = vpack.c.b16 %v156, %v152
  %v185 = vpack.c.b16 %v157, %v153
  %v186 = vpack.c.b16 %v162, %v158
  %v187 = vpack.c.b16 %v163, %v159
  %v188 = vpack.c.b16 %v164, %v160
  %v189 = vpack.c.b16 %v165, %v161
  %v190 = vpack.c.b16 %v170, %v166
  %v191 = vpack.c.b16 %v171, %v167
  %v192 = vpack.c.b16 %v172, %v168
  %v193 = vpack.c.b16 %v173, %v169
  %v194 = vpack.c.b16 %v174, %v174
  %v195 = vpack.c.b16 %v175, %v175
  %v196 = vpack.c.b16 %v176, %v176
  %v197 = vpack.c.b16 %v177, %v177
  %v282 = vunpack.c.l.b16 %v56
  %v283 = vunpack.c.l.b16 %v57
  %v284 = vunpack.c.l.b16 %v58
  %v285 = vunpack.c.l.b16 %v59
  %v286 = vunpack.c.l.b16 %v60
  %v287 = vunpack.c.l.b16 %v61
  %v288 = vunpack.c.l.b16 %v62
  %v289 = vunpack.c.l.b16 %v63
  %v290 = vunpack.c.l.b16 %v64
  %v291 = vunpack.c.l.b16 %v65
  %v292 = vunpack.c.l.b16 %v66
  %v293 = vunpack.c.l.b16 %v67
  %v294 = vunpack.c.l.b16 %v68
  %v295 = vunpack.c.l.b16 %v69
  %v296 = vunpack.c.l.b16 %v70
  %v297 = vunpack.c.l.b16 %v71
  %v298 = vunpack.c.l.b16 %v72
  %v299 = vunpack.c.l.b16 %v73
  %v300 = vunpack.c.l.b16 %v74
  %v301 = vunpack.c.l.b16 %v75
  %v302 = vunpack.c.l.b16 %v76
  %v303 = vunpack.c.l.b16 %v77
  %v304 = vunpack.c.l.b16 %v78
  %v305 = vunpack.c.l.b16 %v79
  %v306 = vunpack.c.l.b16 %v80
  %v307 = vunpack.c.l.b16 %v81
  %v308 = vunpack.c.l.b16 %v82
  %v309 = vunpack.c.l.b16 %v83
  %v310 = vunpack.c.l.b16 %v84
  %v311 = vunpack.c.l.b16 %v85
  %v312 = vunpack.c.l.b16 %v86
  %v313 = vunpack.c.l.b16 %v87
  %v314 = vunpack.c.l.b16 %v88
  %v315 = vunpack.c.l.b16 %v89
  %v316 = vunpack.c.l.b16 %v90
  %v317 = vunpack.c.l.b16 %v91
  %v318 = vunpack.c.l.b16 %v92
  %v319 = vunpack.c.l.b16 %v93
  %v320 = vunpack.c.l.b16 %v94
  %v321 = vunpack.c.l.b16 %v95
  %v322 = vunpack.c.l.b16 %v96
  %v323 = vunpack.c.l.b16 %v97
  %v324 = vunpack.c.l.b16 %v98
  %v325 = vunpack.c.l.b16 %v99
  %v326 = vunpack.c.l.b16 %v100
  %v327 = vunpack.c.l.b16 %v101
  %v328 = vunpack.c.l.b16 %v102
  %v329 = vunpack.c.l.b16 %v103
  %v330 = vunpack.c.l.b16 %v104
  %v331 = vunpack.c.l.b16 %v105
  %v332 = vunpack.c.l.b16 %v106
  %v333 = vunpack.c.l.b16 %v107
  %v334 = vunpack.c.l.b16 %v108
  %v335 = vunpack.c.l.b16 %v109
  %v336 = vunpack.c.l.b16 %v110
  %v337 = vunpack.c.l.b16 %v111
  %v338 = vunpack.c.l.b16 %v112
  %v339 = vunpack.c.l.b16 %v113
  %v340 = vunpack.c.l.b16 %v114
  %v341 = vunpack.c.l.b16 %v115
  %v342 = vunpack.c.l.b16 %v116
  %v343 = vunpack.c.l.b16 %v117
  %v344 = vunpack.c.l.b16 %v118
  %v345 = vunpack.c.l.b16 %v119
  %v346 = vpack.c.b16 %v283, %v282
  %v347 = vpack.c.b16 %v285, %v284
  %v348 = vpack.c.b16 %v287, %v286
  %v349 = vpack.c.b16 %v289, %v288
  %v350 = vpack.c.b16 %v291, %v290
  %v351 = vpack.c.b16 %v293, %v292
  %v352 = vpack.c.b16 %v295, %v294
  %v353 = vpack.c.b16 %v297, %v296
  %v354 = vpack.c.b16 %v299, %v298
  %v355 = vpack.c.b16 %v301, %v300
  %v356 = vpack.c.b16 %v303, %v302
  %v357 = vpack.c.b16 %v305, %v304
  %v358 = vpack.c.b16 %v307, %v306
  %v359 = vpack.c.b16 %v309, %v308
  %v360 = vpack.c.b16 %v311, %v310
  %v361 = vpack.c.b16 %v313, %v312
  %v362 = vpack.c.b16 %v315, %v314
  %v363 = vpack.c.b16 %v317, %v316
  %v364 = vpack.c.b16 %v319, %v318
  %v365 = vpack.c.b16 %v321, %v320
  %v366 = vpack.c.b16 %v323, %v322
  %v367 = vpack.c.b16 %v325, %v324
  %v368 = vpack.c.b16 %v327, %v326
  %v369 = vpack.c.b16 %v329, %v328
  %v370 = vpack.c.b16 %v331, %v330
  %v371 = vpack.c.b16 %v333, %v332
  %v372 = vpack.c.b16 %v335, %v334
  %v373 = vpack.c.b16 %v337, %v336
  %v374 = vpack.c.b16 %v339, %v338
  %v375 = vpack.c.b16 %v341, %v340
  %v376 = vpack.c.b16 %v343, %v342
  %v377 = vpack.c.b16 %v345, %v344
  %410 = vmatpush.bf16.msra.mxu0 %v353
  %411 = vmatpush.bf16.msra.mxu0 %v352
  %412 = vmatpush.bf16.msra.mxu0 %v351
  %413 = vmatpush.bf16.msra.mxu0 %v350
  %414 = vmatpush.bf16.msra.mxu0 %v349
  %415 = vmatpush.bf16.msra.mxu0 %v348
  %416 = vmatpush.bf16.msra.mxu0 %v347
  %417 = vmatpush.bf16.msra.mxu0 %v346
  %418 = vmatmul.bf16.gmra.mxu0 %v178
  %v419 = vpop.f32.mrf.mxu0
  %v420 = vadd.f32 %v122, %v419
  %v421 = vpop.f32.mrf.mxu0
  %v422 = vadd.f32 %v122, %v421
  %423 = vmatmul.bf16.gmra.mxu0 %v182
  %v424 = vpop.f32.mrf.mxu0
  %v425 = vadd.f32 %v122, %v424
  %v426 = vpop.f32.mrf.mxu0
  %v427 = vadd.f32 %v122, %v426
  %428 = vmatmul.bf16.gmra.mxu0 %v186
  %v429 = vpop.f32.mrf.mxu0
  %v430 = vadd.f32 %v122, %v429
  %v431 = vpop.f32.mrf.mxu0
  %v432 = vadd.f32 %v122, %v431
  %433 = vmatmul.bf16.gmra.mxu0 %v190
  %v434 = vpop.f32.mrf.mxu0
  %v435 = vadd.f32 %v122, %v434
  %v436 = vpop.f32.mrf.mxu0
  %v437 = vadd.f32 %v122, %v436
  %438 = vmatmul.bf16.gmra.mxu0 %v194
  %v439 = vpop.f32.mrf.mxu0
  %v440 = vadd.f32 %v122, %v439
  %v441 = vpop.f32.mrf.mxu0
  %442 = vdwg.mxu0
  %443 = vmatpush.bf16.msra.mxu0 %v361
  %444 = vmatpush.bf16.msra.mxu0 %v360
  %445 = vmatpush.bf16.msra.mxu0 %v359
  %446 = vmatpush.bf16.msra.mxu0 %v358
  %447 = vmatpush.bf16.msra.mxu0 %v357
  %448 = vmatpush.bf16.msra.mxu0 %v356
  %449 = vmatpush.bf16.msra.mxu0 %v355
  %450 = vmatpush.bf16.msra.mxu0 %v354
  %451 = vmatmul.bf16.gmra.mxu0 %v179
  %v452 = vpop.f32.mrf.mxu0
  %v453 = vadd.f32 %v420, %v452
  %v454 = vpop.f32.mrf.mxu0
  %v455 = vadd.f32 %v422, %v454
  %456 = vmatmul.bf16.gmra.mxu0 %v183
  %v457 = vpop.f32.mrf.mxu0
  %v458 = vadd.f32 %v425, %v457
  %v459 = vpop.f32.mrf.mxu0
  %v460 = vadd.f32 %v427, %v459
  %461 = vmatmul.bf16.gmra.mxu0 %v187
  %v462 = vpop.f32.mrf.mxu0
  %v463 = vadd.f32 %v430, %v462
  %v464 = vpop.f32.mrf.mxu0
  %v465 = vadd.f32 %v432, %v464
  %466 = vmatmul.bf16.gmra.mxu0 %v191
  %v467 = vpop.f32.mrf.mxu0
  %v468 = vadd.f32 %v435, %v467
  %v469 = vpop.f32.mrf.mxu0
  %v470 = vadd.f32 %v437, %v469
  %471 = vmatmul.bf16.gmra.mxu0 %v195
  %v472 = vpop.f32.mrf.mxu0
  %v473 = vadd.f32 %v440, %v472
  %v474 = vpop.f32.mrf.mxu0
  %475 = vdwg.mxu0
  %476 = vmatpush.bf16.msra.mxu0 %v369
  %477 = vmatpush.bf16.msra.mxu0 %v368
  %478 = vmatpush.bf16.msra.mxu0 %v367
  %479 = vmatpush.bf16.msra.mxu0 %v366
  %480 = vmatpush.bf16.msra.mxu0 %v365
  %481 = vmatpush.bf16.msra.mxu0 %v364
  %482 = vmatpush.bf16.msra.mxu0 %v363
  %483 = vmatpush.bf16.msra.mxu0 %v362
  %484 = vmatmul.bf16.gmra.mxu0 %v180
  %v485 = vpop.f32.mrf.mxu0
  %v486 = vadd.f32 %v453, %v485
  %v487 = vpop.f32.mrf.mxu0
  %v488 = vadd.f32 %v455, %v487
  %489 = vmatmul.bf16.gmra.mxu0 %v184
  %v490 = vpop.f32.mrf.mxu0
  %v491 = vadd.f32 %v458, %v490
  %v492 = vpop.f32.mrf.mxu0
  %v493 = vadd.f32 %v460, %v492
  %494 = vmatmul.bf16.gmra.mxu0 %v188
  %v495 = vpop.f32.mrf.mxu0
  %v496 = vadd.f32 %v463, %v495
  %v497 = vpop.f32.mrf.mxu0
  %v498 = vadd.f32 %v465, %v497
  %499 = vmatmul.bf16.gmra.mxu0 %v192
  %v500 = vpop.f32.mrf.mxu0
  %v501 = vadd.f32 %v468, %v500
  %v502 = vpop.f32.mrf.mxu0
  %v503 = vadd.f32 %v470, %v502
  %504 = vmatmul.bf16.gmra.mxu0 %v196
  %v505 = vpop.f32.mrf.mxu0
  %v506 = vadd.f32 %v473, %v505
  %v507 = vpop.f32.mrf.mxu0
  %508 = vdwg.mxu0
  %509 = vmatpush.bf16.msra.mxu0 %v377
  %510 = vmatpush.bf16.msra.mxu0 %v376
  %511 = vmatpush.bf16.msra.mxu0 %v375
  %512 = vmatpush.bf16.msra.mxu0 %v374
  %513 = vmatpush.bf16.msra.mxu0 %v373
  %514 = vmatpush.bf16.msra.mxu0 %v372
  %515 = vmatpush.bf16.msra.mxu0 %v371
  %516 = vmatpush.bf16.msra.mxu0 %v370
  %517 = vmatmul.bf16.gmra.mxu0 %v181
  %v518 = vpop.f32.mrf.mxu0
  %v519 = vadd.f32 %v486, %v518
  %v520 = vpop.f32.mrf.mxu0
  %v521 = vadd.f32 %v488, %v520
  %522 = vmatmul.bf16.gmra.mxu0 %v185
  %v523 = vpop.f32.mrf.mxu0
  %v524 = vadd.f32 %v491, %v523
  %v525 = vpop.f32.mrf.mxu0
  %v526 = vadd.f32 %v493, %v525
  %527 = vmatmul.bf16.gmra.mxu0 %v189
  %v528 = vpop.f32.mrf.mxu0
  %v529 = vadd.f32 %v496, %v528
  %v530 = vpop.f32.mrf.mxu0
  %v531 = vadd.f32 %v498, %v530
  %532 = vmatmul.bf16.gmra.mxu0 %v193
  %v533 = vpop.f32.mrf.mxu0
  %v534 = vadd.f32 %v501, %v533
  %v535 = vpop.f32.mrf.mxu0
  %v536 = vadd.f32 %v503, %v535
  %537 = vmatmul.bf16.gmra.mxu0 %v197
  %v538 = vpop.f32.mrf.mxu0
  %v539 = vadd.f32 %v506, %v538
  %v540 = vpop.f32.mrf.mxu0
  %541 = vdwg.mxu0
  %v542 = vmax.f32 %v519, 0.0
  %v543 = vmax.f32 %v521, 0.0
  %v544 = vmax.f32 %v524, 0.0
  %v545 = vmax.f32 %v526, 0.0
  %v546 = vmax.f32 %v529, 0.0
  %v547 = vmax.f32 %v531, 0.0
  %v548 = vmax.f32 %v534, 0.0
  %v549 = vmax.f32 %v536, 0.0
  %v550 = vmax.f32 %v539, 0.0
  %v551 = vpack.c.bf16 %v542, %v542
  %v552 = vld [vmem:[%s3] sm:$0xf]
  %v553 = vld [vmem:[%s3 + $0x4] sm:$0xf]
  %v554 = vld [vmem:[%s3 + $0x8] sm:$0xf]
  %v555 = vld [vmem:[%s3 + $0xc] sm:$0xf]
  %v556 = vld [vmem:[%s3 + $0x10] sm:$0xf]
  %v557 = vld [vmem:[%s3 + $0x14] sm:$0xf]
  %v558 = vld [vmem:[%s3 + $0x18] sm:$0xf]
  %v559 = vld [vmem:[%s3 + $0x1c] sm:$0xf]
  %v560 = vld [vmem:[%s3 + $0x20] sm:$0xf]
  %v561 = vld [vmem:[%s3 + $0x24] sm:$0xf]
  %v562 = vld [vmem:[%s3 + $0x28] sm:$0xf]
  %v563 = vld [vmem:[%s3 + $0x2c] sm:$0xf]
  %v564 = vld [vmem:[%s3 + $0x30] sm:$0xf]
  %v565 = vld [vmem:[%s3 + $0x34] sm:$0xf]
  %v566 = vld [vmem:[%s3 + $0x38] sm:$0xf]
  %v567 = vld [vmem:[%s3 + $0x3c] sm:$0xf]
  %v568 = vpack.c.bf16 %v543, %v543
  %s569 = scalar_lea.vmem %s3, 64
  %v570 = vld [vmem:[%s569] sm:$0xf]
  %v571 = vld [vmem:[%s569 + $0x4] sm:$0xf]
  %v572 = vld [vmem:[%s569 + $0x8] sm:$0xf]
  %v573 = vld [vmem:[%s569 + $0xc] sm:$0xf]
  %v574 = vld [vmem:[%s569 + $0x10] sm:$0xf]
  %v575 = vld [vmem:[%s569 + $0x14] sm:$0xf]
  %v576 = vld [vmem:[%s569 + $0x18] sm:$0xf]
  %v577 = vld [vmem:[%s569 + $0x1c] sm:$0xf]
  %v578 = vld [vmem:[%s569 + $0x20] sm:$0xf]
  %v579 = vld [vmem:[%s569 + $0x24] sm:$0xf]
  %v580 = vld [vmem:[%s569 + $0x28] sm:$0xf]
  %v581 = vld [vmem:[%s569 + $0x2c] sm:$0xf]
  %v582 = vld [vmem:[%s569 + $0x30] sm:$0xf]
  %v583 = vld [vmem:[%s569 + $0x34] sm:$0xf]
  %v584 = vld [vmem:[%s569 + $0x38] sm:$0xf]
  %v585 = vld [vmem:[%s569 + $0x3c] sm:$0xf]
  %v602 = vunpack.c.l.b16 %v570
  %v603 = vunpack.c.l.b16 %v571
  %v604 = vunpack.c.l.b16 %v572
  %v605 = vunpack.c.l.b16 %v573
  %v606 = vunpack.c.l.b16 %v574
  %v607 = vunpack.c.l.b16 %v575
  %v608 = vunpack.c.l.b16 %v576
  %v609 = vunpack.c.l.b16 %v577
  %v610 = vunpack.c.l.b16 %v578
  %v611 = vunpack.c.l.b16 %v579
  %v612 = vunpack.c.l.b16 %v580
  %v613 = vunpack.c.l.b16 %v581
  %v614 = vunpack.c.l.b16 %v582
  %v615 = vunpack.c.l.b16 %v583
  %v616 = vunpack.c.l.b16 %v584
  %v617 = vunpack.c.l.b16 %v585
  %v618 = vpack.c.b16 %v603, %v602
  %v619 = vpack.c.b16 %v605, %v604
  %v620 = vpack.c.b16 %v607, %v606
  %v621 = vpack.c.b16 %v609, %v608
  %v622 = vpack.c.b16 %v611, %v610
  %v623 = vpack.c.b16 %v613, %v612
  %v624 = vpack.c.b16 %v615, %v614
  %v625 = vpack.c.b16 %v617, %v616
  %634 = vmatpush.bf16.msra.mxu0 %v625
  %635 = vmatpush.bf16.msra.mxu0 %v624
  %636 = vmatpush.bf16.msra.mxu0 %v623
  %637 = vmatpush.bf16.msra.mxu0 %v622
  %638 = vmatpush.bf16.msra.mxu0 %v621
  %639 = vmatpush.bf16.msra.mxu0 %v620
  %640 = vmatpush.bf16.msra.mxu0 %v619
  %641 = vmatpush.bf16.msra.mxu0 %v618
  %642 = vmatmul.bf16.gmra.mxu0 %v568
  %v643 = vpop.f32.mrf.mxu0
  %v644 = vadd.f32 0.0, %v643
  %v645 = vpop.f32.mrf.mxu0
  %646 = vdwg.mxu0
  %v663 = vunpack.c.l.b16 %v552
  %v664 = vunpack.c.l.b16 %v553
  %v665 = vunpack.c.l.b16 %v554
  %v666 = vunpack.c.l.b16 %v555
  %v667 = vunpack.c.l.b16 %v556
  %v668 = vunpack.c.l.b16 %v557
  %v669 = vunpack.c.l.b16 %v558
  %v670 = vunpack.c.l.b16 %v559
  %v671 = vunpack.c.l.b16 %v560
  %v672 = vunpack.c.l.b16 %v561
  %v673 = vunpack.c.l.b16 %v562
  %v674 = vunpack.c.l.b16 %v563
  %v675 = vunpack.c.l.b16 %v564
  %v676 = vunpack.c.l.b16 %v565
  %v677 = vunpack.c.l.b16 %v566
  %v678 = vunpack.c.l.b16 %v567
  %v679 = vpack.c.b16 %v664, %v663
  %v680 = vpack.c.b16 %v666, %v665
  %v681 = vpack.c.b16 %v668, %v667
  %v682 = vpack.c.b16 %v670, %v669
  %v683 = vpack.c.b16 %v672, %v671
  %v684 = vpack.c.b16 %v674, %v673
  %v685 = vpack.c.b16 %v676, %v675
  %v686 = vpack.c.b16 %v678, %v677
  %695 = vmatpush.bf16.msra.mxu0 %v686
  %696 = vmatpush.bf16.msra.mxu0 %v685
  %697 = vmatpush.bf16.msra.mxu0 %v684
  %698 = vmatpush.bf16.msra.mxu0 %v683
  %699 = vmatpush.bf16.msra.mxu0 %v682
  %700 = vmatpush.bf16.msra.mxu0 %v681
  %701 = vmatpush.bf16.msra.mxu0 %v680
  %702 = vmatpush.bf16.msra.mxu0 %v679
  %703 = vmatmul.bf16.gmra.mxu0 %v551
  %v704 = vpop.f32.mrf.mxu0
  %v705 = vadd.f32 %v644, %v704
  %v706 = vpop.f32.mrf.mxu0
  %707 = vdwg.mxu0
  %v708 = vpack.c.bf16 %v544, %v544
  %s709 = scalar_lea.vmem %s3, 128
  %v710 = vld [vmem:[%s709] sm:$0xf]
  %v711 = vld [vmem:[%s709 + $0x4] sm:$0xf]
  %v712 = vld [vmem:[%s709 + $0x8] sm:$0xf]
  %v713 = vld [vmem:[%s709 + $0xc] sm:$0xf]
  %v714 = vld [vmem:[%s709 + $0x10] sm:$0xf]
  %v715 = vld [vmem:[%s709 + $0x14] sm:$0xf]
  %v716 = vld [vmem:[%s709 + $0x18] sm:$0xf]
  %v717 = vld [vmem:[%s709 + $0x1c] sm:$0xf]
  %v718 = vld [vmem:[%s709 + $0x20] sm:$0xf]
  %v719 = vld [vmem:[%s709 + $0x24] sm:$0xf]
  %v720 = vld [vmem:[%s709 + $0x28] sm:$0xf]
  %v721 = vld [vmem:[%s709 + $0x2c] sm:$0xf]
  %v722 = vld [vmem:[%s709 + $0x30] sm:$0xf]
  %v723 = vld [vmem:[%s709 + $0x34] sm:$0xf]
  %v724 = vld [vmem:[%s709 + $0x38] sm:$0xf]
  %v725 = vld [vmem:[%s709 + $0x3c] sm:$0xf]
  %v742 = vunpack.c.l.b16 %v710
  %v743 = vunpack.c.l.b16 %v711
  %v744 = vunpack.c.l.b16 %v712
  %v745 = vunpack.c.l.b16 %v713
  %v746 = vunpack.c.l.b16 %v714
  %v747 = vunpack.c.l.b16 %v715
  %v748 = vunpack.c.l.b16 %v716
  %v749 = vunpack.c.l.b16 %v717
  %v750 = vunpack.c.l.b16 %v718
  %v751 = vunpack.c.l.b16 %v719
  %v752 = vunpack.c.l.b16 %v720
  %v753 = vunpack.c.l.b16 %v721
  %v754 = vunpack.c.l.b16 %v722
  %v755 = vunpack.c.l.b16 %v723
  %v756 = vunpack.c.l.b16 %v724
  %v757 = vunpack.c.l.b16 %v725
  %v758 = vpack.c.b16 %v743, %v742
  %v759 = vpack.c.b16 %v745, %v744
  %v760 = vpack.c.b16 %v747, %v746
  %v761 = vpack.c.b16 %v749, %v748
  %v762 = vpack.c.b16 %v751, %v750
  %v763 = vpack.c.b16 %v753, %v752
  %v764 = vpack.c.b16 %v755, %v754
  %v765 = vpack.c.b16 %v757, %v756
  %774 = vmatpush.bf16.msra.mxu0 %v765
  %775 = vmatpush.bf16.msra.mxu0 %v764
  %776 = vmatpush.bf16.msra.mxu0 %v763
  %777 = vmatpush.bf16.msra.mxu0 %v762
  %778 = vmatpush.bf16.msra.mxu0 %v761
  %779 = vmatpush.bf16.msra.mxu0 %v760
  %780 = vmatpush.bf16.msra.mxu0 %v759
  %781 = vmatpush.bf16.msra.mxu0 %v758
  %782 = vmatmul.bf16.gmra.mxu0 %v708
  %v783 = vpop.f32.mrf.mxu0
  %v784 = vadd.f32 0.0, %v783
  %v785 = vpop.f32.mrf.mxu0
  %786 = vdwg.mxu0
  %v787 = vadd.f32 %v705, %v784
  %v788 = vpack.c.bf16 %v545, %v545
  %s789 = scalar_lea.vmem %s3, 192
  %v790 = vld [vmem:[%s789] sm:$0xf]
  %v791 = vld [vmem:[%s789 + $0x4] sm:$0xf]
  %v792 = vld [vmem:[%s789 + $0x8] sm:$0xf]
  %v793 = vld [vmem:[%s789 + $0xc] sm:$0xf]
  %v794 = vld [vmem:[%s789 + $0x10] sm:$0xf]
  %v795 = vld [vmem:[%s789 + $0x14] sm:$0xf]
  %v796 = vld [vmem:[%s789 + $0x18] sm:$0xf]
  %v797 = vld [vmem:[%s789 + $0x1c] sm:$0xf]
  %v798 = vld [vmem:[%s789 + $0x20] sm:$0xf]
  %v799 = vld [vmem:[%s789 + $0x24] sm:$0xf]
  %v800 = vld [vmem:[%s789 + $0x28] sm:$0xf]
  %v801 = vld [vmem:[%s789 + $0x2c] sm:$0xf]
  %v802 = vld [vmem:[%s789 + $0x30] sm:$0xf]
  %v803 = vld [vmem:[%s789 + $0x34] sm:$0xf]
  %v804 = vld [vmem:[%s789 + $0x38] sm:$0xf]
  %v805 = vld [vmem:[%s789 + $0x3c] sm:$0xf]
  %v822 = vunpack.c.l.b16 %v790
  %v823 = vunpack.c.l.b16 %v791
  %v824 = vunpack.c.l.b16 %v792
  %v825 = vunpack.c.l.b16 %v793
  %v826 = vunpack.c.l.b16 %v794
  %v827 = vunpack.c.l.b16 %v795
  %v828 = vunpack.c.l.b16 %v796
  %v829 = vunpack.c.l.b16 %v797
  %v830 = vunpack.c.l.b16 %v798
  %v831 = vunpack.c.l.b16 %v799
  %v832 = vunpack.c.l.b16 %v800
  %v833 = vunpack.c.l.b16 %v801
  %v834 = vunpack.c.l.b16 %v802
  %v835 = vunpack.c.l.b16 %v803
  %v836 = vunpack.c.l.b16 %v804
  %v837 = vunpack.c.l.b16 %v805
  %v838 = vpack.c.b16 %v823, %v822
  %v839 = vpack.c.b16 %v825, %v824
  %v840 = vpack.c.b16 %v827, %v826
  %v841 = vpack.c.b16 %v829, %v828
  %v842 = vpack.c.b16 %v831, %v830
  %v843 = vpack.c.b16 %v833, %v832
  %v844 = vpack.c.b16 %v835, %v834
  %v845 = vpack.c.b16 %v837, %v836
  %854 = vmatpush.bf16.msra.mxu0 %v845
  %855 = vmatpush.bf16.msra.mxu0 %v844
  %856 = vmatpush.bf16.msra.mxu0 %v843
  %857 = vmatpush.bf16.msra.mxu0 %v842
  %858 = vmatpush.bf16.msra.mxu0 %v841
  %859 = vmatpush.bf16.msra.mxu0 %v840
  %860 = vmatpush.bf16.msra.mxu0 %v839
  %861 = vmatpush.bf16.msra.mxu0 %v838
  %862 = vmatmul.bf16.gmra.mxu0 %v788
  %v863 = vpop.f32.mrf.mxu0
  %v864 = vadd.f32 0.0, %v863
  %v865 = vpop.f32.mrf.mxu0
  %866 = vdwg.mxu0
  %v867 = vadd.f32 %v787, %v864
  %v868 = vpack.c.bf16 %v546, %v546
  %s869 = scalar_lea.vmem %s3, 256
  %v870 = vld [vmem:[%s869] sm:$0xf]
  %v871 = vld [vmem:[%s869 + $0x4] sm:$0xf]
  %v872 = vld [vmem:[%s869 + $0x8] sm:$0xf]
  %v873 = vld [vmem:[%s869 + $0xc] sm:$0xf]
  %v874 = vld [vmem:[%s869 + $0x10] sm:$0xf]
  %v875 = vld [vmem:[%s869 + $0x14] sm:$0xf]
  %v876 = vld [vmem:[%s869 + $0x18] sm:$0xf]
  %v877 = vld [vmem:[%s869 + $0x1c] sm:$0xf]
  %v878 = vld [vmem:[%s869 + $0x20] sm:$0xf]
  %v879 = vld [vmem:[%s869 + $0x24] sm:$0xf]
  %v880 = vld [vmem:[%s869 + $0x28] sm:$0xf]
  %v881 = vld [vmem:[%s869 + $0x2c] sm:$0xf]
  %v882 = vld [vmem:[%s869 + $0x30] sm:$0xf]
  %v883 = vld [vmem:[%s869 + $0x34] sm:$0xf]
  %v884 = vld [vmem:[%s869 + $0x38] sm:$0xf]
  %v885 = vld [vmem:[%s869 + $0x3c] sm:$0xf]
  %v902 = vunpack.c.l.b16 %v870
  %v903 = vunpack.c.l.b16 %v871
  %v904 = vunpack.c.l.b16 %v872
  %v905 = vunpack.c.l.b16 %v873
  %v906 = vunpack.c.l.b16 %v874
  %v907 = vunpack.c.l.b16 %v875
  %v908 = vunpack.c.l.b16 %v876
  %v909 = vunpack.c.l.b16 %v877
  %v910 = vunpack.c.l.b16 %v878
  %v911 = vunpack.c.l.b16 %v879
  %v912 = vunpack.c.l.b16 %v880
  %v913 = vunpack.c.l.b16 %v881
  %v914 = vunpack.c.l.b16 %v882
  %v915 = vunpack.c.l.b16 %v883
  %v916 = vunpack.c.l.b16 %v884
  %v917 = vunpack.c.l.b16 %v885
  %v918 = vpack.c.b16 %v903, %v902
  %v919 = vpack.c.b16 %v905, %v904
  %v920 = vpack.c.b16 %v907, %v906
  %v921 = vpack.c.b16 %v909, %v908
  %v922 = vpack.c.b16 %v911, %v910
  %v923 = vpack.c.b16 %v913, %v912
  %v924 = vpack.c.b16 %v915, %v914
  %v925 = vpack.c.b16 %v917, %v916
  %934 = vmatpush.bf16.msra.mxu0 %v925
  %935 = vmatpush.bf16.msra.mxu0 %v924
  %936 = vmatpush.bf16.msra.mxu0 %v923
  %937 = vmatpush.bf16.msra.mxu0 %v922
  %938 = vmatpush.bf16.msra.mxu0 %v921
  %939 = vmatpush.bf16.msra.mxu0 %v920
  %940 = vmatpush.bf16.msra.mxu0 %v919
  %941 = vmatpush.bf16.msra.mxu0 %v918
  %942 = vmatmul.bf16.gmra.mxu0 %v868
  %v943 = vpop.f32.mrf.mxu0
  %v944 = vadd.f32 0.0, %v943
  %v945 = vpop.f32.mrf.mxu0
  %946 = vdwg.mxu0
  %v947 = vadd.f32 %v867, %v944
  %v948 = vpack.c.bf16 %v547, %v547
  %s949 = scalar_lea.vmem %s3, 320
  %v950 = vld [vmem:[%s949] sm:$0xf]
  %v951 = vld [vmem:[%s949 + $0x4] sm:$0xf]
  %v952 = vld [vmem:[%s949 + $0x8] sm:$0xf]
  %v953 = vld [vmem:[%s949 + $0xc] sm:$0xf]
  %v954 = vld [vmem:[%s949 + $0x10] sm:$0xf]
  %v955 = vld [vmem:[%s949 + $0x14] sm:$0xf]
  %v956 = vld [vmem:[%s949 + $0x18] sm:$0xf]
  %v957 = vld [vmem:[%s949 + $0x1c] sm:$0xf]
  %v958 = vld [vmem:[%s949 + $0x20] sm:$0xf]
  %v959 = vld [vmem:[%s949 + $0x24] sm:$0xf]
  %v960 = vld [vmem:[%s949 + $0x28] sm:$0xf]
  %v961 = vld [vmem:[%s949 + $0x2c] sm:$0xf]
  %v962 = vld [vmem:[%s949 + $0x30] sm:$0xf]
  %v963 = vld [vmem:[%s949 + $0x34] sm:$0xf]
  %v964 = vld [vmem:[%s949 + $0x38] sm:$0xf]
  %v965 = vld [vmem:[%s949 + $0x3c] sm:$0xf]
  %v982 = vunpack.c.l.b16 %v950
  %v983 = vunpack.c.l.b16 %v951
  %v984 = vunpack.c.l.b16 %v952
  %v985 = vunpack.c.l.b16 %v953
  %v986 = vunpack.c.l.b16 %v954
  %v987 = vunpack.c.l.b16 %v955
  %v988 = vunpack.c.l.b16 %v956
  %v989 = vunpack.c.l.b16 %v957
  %v990 = vunpack.c.l.b16 %v958
  %v991 = vunpack.c.l.b16 %v959
  %v992 = vunpack.c.l.b16 %v960
  %v993 = vunpack.c.l.b16 %v961
  %v994 = vunpack.c.l.b16 %v962
  %v995 = vunpack.c.l.b16 %v963
  %v996 = vunpack.c.l.b16 %v964
  %v997 = vunpack.c.l.b16 %v965
  %v998 = vpack.c.b16 %v983, %v982
  %v999 = vpack.c.b16 %v985, %v984
  %v1000 = vpack.c.b16 %v987, %v986
  %v1001 = vpack.c.b16 %v989, %v988
  %v1002 = vpack.c.b16 %v991, %v990
  %v1003 = vpack.c.b16 %v993, %v992
  %v1004 = vpack.c.b16 %v995, %v994
  %v1005 = vpack.c.b16 %v997, %v996
  %1014 = vmatpush.bf16.msra.mxu0 %v1005
  %1015 = vmatpush.bf16.msra.mxu0 %v1004
  %1016 = vmatpush.bf16.msra.mxu0 %v1003
  %1017 = vmatpush.bf16.msra.mxu0 %v1002
  %1018 = vmatpush.bf16.msra.mxu0 %v1001
  %1019 = vmatpush.bf16.msra.mxu0 %v1000
  %1020 = vmatpush.bf16.msra.mxu0 %v999
  %1021 = vmatpush.bf16.msra.mxu0 %v998
  %1022 = vmatmul.bf16.gmra.mxu0 %v948
  %v1023 = vpop.f32.mrf.mxu0
  %v1024 = vadd.f32 0.0, %v1023
  %v1025 = vpop.f32.mrf.mxu0
  %1026 = vdwg.mxu0
  %v1027 = vadd.f32 %v947, %v1024
  %v1028 = vpack.c.bf16 %v548, %v548
  %s1029 = scalar_lea.vmem %s3, 384
  %v1030 = vld [vmem:[%s1029] sm:$0xf]
  %v1031 = vld [vmem:[%s1029 + $0x4] sm:$0xf]
  %v1032 = vld [vmem:[%s1029 + $0x8] sm:$0xf]
  %v1033 = vld [vmem:[%s1029 + $0xc] sm:$0xf]
  %v1034 = vld [vmem:[%s1029 + $0x10] sm:$0xf]
  %v1035 = vld [vmem:[%s1029 + $0x14] sm:$0xf]
  %v1036 = vld [vmem:[%s1029 + $0x18] sm:$0xf]
  %v1037 = vld [vmem:[%s1029 + $0x1c] sm:$0xf]
  %v1038 = vld [vmem:[%s1029 + $0x20] sm:$0xf]
  %v1039 = vld [vmem:[%s1029 + $0x24] sm:$0xf]
  %v1040 = vld [vmem:[%s1029 + $0x28] sm:$0xf]
  %v1041 = vld [vmem:[%s1029 + $0x2c] sm:$0xf]
  %v1042 = vld [vmem:[%s1029 + $0x30] sm:$0xf]
  %v1043 = vld [vmem:[%s1029 + $0x34] sm:$0xf]
  %v1044 = vld [vmem:[%s1029 + $0x38] sm:$0xf]
  %v1045 = vld [vmem:[%s1029 + $0x3c] sm:$0xf]
  %v1062 = vunpack.c.l.b16 %v1030
  %v1063 = vunpack.c.l.b16 %v1031
  %v1064 = vunpack.c.l.b16 %v1032
  %v1065 = vunpack.c.l.b16 %v1033
  %v1066 = vunpack.c.l.b16 %v1034
  %v1067 = vunpack.c.l.b16 %v1035
  %v1068 = vunpack.c.l.b16 %v1036
  %v1069 = vunpack.c.l.b16 %v1037
  %v1070 = vunpack.c.l.b16 %v1038
  %v1071 = vunpack.c.l.b16 %v1039
  %v1072 = vunpack.c.l.b16 %v1040
  %v1073 = vunpack.c.l.b16 %v1041
  %v1074 = vunpack.c.l.b16 %v1042
  %v1075 = vunpack.c.l.b16 %v1043
  %v1076 = vunpack.c.l.b16 %v1044
  %v1077 = vunpack.c.l.b16 %v1045
  %v1078 = vpack.c.b16 %v1063, %v1062
  %v1079 = vpack.c.b16 %v1065, %v1064
  %v1080 = vpack.c.b16 %v1067, %v1066
  %v1081 = vpack.c.b16 %v1069, %v1068
  %v1082 = vpack.c.b16 %v1071, %v1070
  %v1083 = vpack.c.b16 %v1073, %v1072
  %v1084 = vpack.c.b16 %v1075, %v1074
  %v1085 = vpack.c.b16 %v1077, %v1076
  %1094 = vmatpush.bf16.msra.mxu0 %v1085
  %1095 = vmatpush.bf16.msra.mxu0 %v1084
  %1096 = vmatpush.bf16.msra.mxu0 %v1083
  %1097 = vmatpush.bf16.msra.mxu0 %v1082
  %1098 = vmatpush.bf16.msra.mxu0 %v1081
  %1099 = vmatpush.bf16.msra.mxu0 %v1080
  %1100 = vmatpush.bf16.msra.mxu0 %v1079
  %1101 = vmatpush.bf16.msra.mxu0 %v1078
  %1102 = vmatmul.bf16.gmra.mxu0 %v1028
  %v1103 = vpop.f32.mrf.mxu0
  %v1104 = vadd.f32 0.0, %v1103
  %v1105 = vpop.f32.mrf.mxu0
  %1106 = vdwg.mxu0
  %v1107 = vadd.f32 %v1027, %v1104
  %v1108 = vpack.c.bf16 %v549, %v549
  %s1109 = scalar_lea.vmem %s3, 448
  %v1110 = vld [vmem:[%s1109] sm:$0xf]
  %v1111 = vld [vmem:[%s1109 + $0x4] sm:$0xf]
  %v1112 = vld [vmem:[%s1109 + $0x8] sm:$0xf]
  %v1113 = vld [vmem:[%s1109 + $0xc] sm:$0xf]
  %v1114 = vld [vmem:[%s1109 + $0x10] sm:$0xf]
  %v1115 = vld [vmem:[%s1109 + $0x14] sm:$0xf]
  %v1116 = vld [vmem:[%s1109 + $0x18] sm:$0xf]
  %v1117 = vld [vmem:[%s1109 + $0x1c] sm:$0xf]
  %v1118 = vld [vmem:[%s1109 + $0x20] sm:$0xf]
  %v1119 = vld [vmem:[%s1109 + $0x24] sm:$0xf]
  %v1120 = vld [vmem:[%s1109 + $0x28] sm:$0xf]
  %v1121 = vld [vmem:[%s1109 + $0x2c] sm:$0xf]
  %v1122 = vld [vmem:[%s1109 + $0x30] sm:$0xf]
  %v1123 = vld [vmem:[%s1109 + $0x34] sm:$0xf]
  %v1124 = vld [vmem:[%s1109 + $0x38] sm:$0xf]
  %v1125 = vld [vmem:[%s1109 + $0x3c] sm:$0xf]
  %v1142 = vunpack.c.l.b16 %v1110
  %v1143 = vunpack.c.l.b16 %v1111
  %v1144 = vunpack.c.l.b16 %v1112
  %v1145 = vunpack.c.l.b16 %v1113
  %v1146 = vunpack.c.l.b16 %v1114
  %v1147 = vunpack.c.l.b16 %v1115
  %v1148 = vunpack.c.l.b16 %v1116
  %v1149 = vunpack.c.l.b16 %v1117
  %v1150 = vunpack.c.l.b16 %v1118
  %v1151 = vunpack.c.l.b16 %v1119
  %v1152 = vunpack.c.l.b16 %v1120
  %v1153 = vunpack.c.l.b16 %v1121
  %v1154 = vunpack.c.l.b16 %v1122
  %v1155 = vunpack.c.l.b16 %v1123
  %v1156 = vunpack.c.l.b16 %v1124
  %v1157 = vunpack.c.l.b16 %v1125
  %v1158 = vpack.c.b16 %v1143, %v1142
  %v1159 = vpack.c.b16 %v1145, %v1144
  %v1160 = vpack.c.b16 %v1147, %v1146
  %v1161 = vpack.c.b16 %v1149, %v1148
  %v1162 = vpack.c.b16 %v1151, %v1150
  %v1163 = vpack.c.b16 %v1153, %v1152
  %v1164 = vpack.c.b16 %v1155, %v1154
  %v1165 = vpack.c.b16 %v1157, %v1156
  %1174 = vmatpush.bf16.msra.mxu0 %v1165
  %1175 = vmatpush.bf16.msra.mxu0 %v1164
  %1176 = vmatpush.bf16.msra.mxu0 %v1163
  %1177 = vmatpush.bf16.msra.mxu0 %v1162
  %1178 = vmatpush.bf16.msra.mxu0 %v1161
  %1179 = vmatpush.bf16.msra.mxu0 %v1160
  %1180 = vmatpush.bf16.msra.mxu0 %v1159
  %1181 = vmatpush.bf16.msra.mxu0 %v1158
  %1182 = vmatmul.bf16.gmra.mxu0 %v1108
  %v1183 = vpop.f32.mrf.mxu0
  %v1184 = vadd.f32 0.0, %v1183
  %v1185 = vpop.f32.mrf.mxu0
  %1186 = vdwg.mxu0
  %v1187 = vadd.f32 %v1107, %v1184
  %v1188 = vpack.c.bf16 %v550, %v550
  %s1189 = scalar_lea.vmem %s3, 512
  %v1190 = vld [vmem:[%s1189] sm:$0xf]
  %v1191 = vld [vmem:[%s1189 + $0x4] sm:$0xf]
  %v1192 = vld [vmem:[%s1189 + $0x8] sm:$0xf]
  %v1193 = vld [vmem:[%s1189 + $0xc] sm:$0xf]
  %v1194 = vld [vmem:[%s1189 + $0x10] sm:$0xf]
  %v1195 = vld [vmem:[%s1189 + $0x14] sm:$0xf]
  %v1196 = vld [vmem:[%s1189 + $0x18] sm:$0xf]
  %v1197 = vld [vmem:[%s1189 + $0x1c] sm:$0xf]
  %v1198 = vld [vmem:[%s1189 + $0x20] sm:$0xf]
  %v1199 = vld [vmem:[%s1189 + $0x24] sm:$0xf]
  %v1200 = vld [vmem:[%s1189 + $0x28] sm:$0xf]
  %v1201 = vld [vmem:[%s1189 + $0x2c] sm:$0xf]
  %v1202 = vld [vmem:[%s1189 + $0x30] sm:$0xf]
  %v1203 = vld [vmem:[%s1189 + $0x34] sm:$0xf]
  %v1204 = vld [vmem:[%s1189 + $0x38] sm:$0xf]
  %v1205 = vld [vmem:[%s1189 + $0x3c] sm:$0xf]
  %v1222 = vunpack.c.l.b16 %v1190
  %v1223 = vunpack.c.l.b16 %v1191
  %v1224 = vunpack.c.l.b16 %v1192
  %v1225 = vunpack.c.l.b16 %v1193
  %v1226 = vunpack.c.l.b16 %v1194
  %v1227 = vunpack.c.l.b16 %v1195
  %v1228 = vunpack.c.l.b16 %v1196
  %v1229 = vunpack.c.l.b16 %v1197
  %v1230 = vunpack.c.l.b16 %v1198
  %v1231 = vunpack.c.l.b16 %v1199
  %v1232 = vunpack.c.l.b16 %v1200
  %v1233 = vunpack.c.l.b16 %v1201
  %v1234 = vunpack.c.l.b16 %v1202
  %v1235 = vunpack.c.l.b16 %v1203
  %v1236 = vunpack.c.l.b16 %v1204
  %v1237 = vunpack.c.l.b16 %v1205
  %v1238 = vpack.c.b16 %v1223, %v1222
  %v1239 = vpack.c.b16 %v1225, %v1224
  %v1240 = vpack.c.b16 %v1227, %v1226
  %v1241 = vpack.c.b16 %v1229, %v1228
  %v1242 = vpack.c.b16 %v1231, %v1230
  %v1243 = vpack.c.b16 %v1233, %v1232
  %v1244 = vpack.c.b16 %v1235, %v1234
  %v1245 = vpack.c.b16 %v1237, %v1236
  %1254 = vmatpush.bf16.msra.mxu0 %v1245
  %1255 = vmatpush.bf16.msra.mxu0 %v1244
  %1256 = vmatpush.bf16.msra.mxu0 %v1243
  %1257 = vmatpush.bf16.msra.mxu0 %v1242
  %1258 = vmatpush.bf16.msra.mxu0 %v1241
  %1259 = vmatpush.bf16.msra.mxu0 %v1240
  %1260 = vmatpush.bf16.msra.mxu0 %v1239
  %1261 = vmatpush.bf16.msra.mxu0 %v1238
  %1262 = vmatmul.bf16.gmra.mxu0 %v1188
  %v1263 = vpop.f32.mrf.mxu0
  %v1264 = vadd.f32 0.0, %v1263
  %v1265 = vpop.f32.mrf.mxu0
  %1266 = vdwg.mxu0
  %v1267 = vadd.f32 %v1187, %v1264
  %v1268 = vld [vmem:[%s4] sm:$0x1]
  %v1270 = vperm.slane %v1268, 0
  %v1272 = vadd.f32 %v1267, %v1270
  %v1273 = vmax.f32 %v1272, 0.0
  %v1274 = vpack.c.bf16 %v1273, %v1273
  %v1275 = vld [vmem:[%s5] sm:$0xf]
  %v1276 = vld [vmem:[%s5 + $0x4] sm:$0xf]
  %v1277 = vld [vmem:[%s5 + $0x8] sm:$0xf]
  %v1278 = vld [vmem:[%s5 + $0xc] sm:$0xf]
  %v1279 = vld [vmem:[%s5 + $0x10] sm:$0xf]
  %v1280 = vld [vmem:[%s5 + $0x14] sm:$0xf]
  %v1281 = vld [vmem:[%s5 + $0x18] sm:$0xf]
  %v1282 = vld [vmem:[%s5 + $0x1c] sm:$0xf]
  %v1283 = vld [vmem:[%s5 + $0x20] sm:$0xf]
  %v1284 = vld [vmem:[%s5 + $0x24] sm:$0xf]
  %v1285 = vld [vmem:[%s5 + $0x28] sm:$0xf]
  %v1286 = vld [vmem:[%s5 + $0x2c] sm:$0xf]
  %v1287 = vld [vmem:[%s5 + $0x30] sm:$0xf]
  %v1288 = vld [vmem:[%s5 + $0x34] sm:$0xf]
  %v1289 = vld [vmem:[%s5 + $0x38] sm:$0xf]
  %v1290 = vld [vmem:[%s5 + $0x3c] sm:$0xf]
  %v1291 = vld [vmem:[%s6] sm:$0x1]
  %v1293 = vperm.slane %v1291, 0
  %v1311 = vunpack.c.l.b16 %v1275
  %v1312 = vunpack.c.l.b16 %v1276
  %v1313 = vunpack.c.l.b16 %v1277
  %v1314 = vunpack.c.l.b16 %v1278
  %v1315 = vunpack.c.l.b16 %v1279
  %v1316 = vunpack.c.l.b16 %v1280
  %v1317 = vunpack.c.l.b16 %v1281
  %v1318 = vunpack.c.l.b16 %v1282
  %v1319 = vunpack.c.l.b16 %v1283
  %v1320 = vunpack.c.l.b16 %v1284
  %v1321 = vunpack.c.l.b16 %v1285
  %v1322 = vunpack.c.l.b16 %v1286
  %v1323 = vunpack.c.l.b16 %v1287
  %v1324 = vunpack.c.l.b16 %v1288
  %v1325 = vunpack.c.l.b16 %v1289
  %v1326 = vunpack.c.l.b16 %v1290
  %v1327 = vpack.c.b16 %v1312, %v1311
  %v1328 = vpack.c.b16 %v1314, %v1313
  %v1329 = vpack.c.b16 %v1316, %v1315
  %v1330 = vpack.c.b16 %v1318, %v1317
  %v1331 = vpack.c.b16 %v1320, %v1319
  %v1332 = vpack.c.b16 %v1322, %v1321
  %v1333 = vpack.c.b16 %v1324, %v1323
  %v1334 = vpack.c.b16 %v1326, %v1325
  %1343 = vmatpush.bf16.msra.mxu0 %v1334
  %1344 = vmatpush.bf16.msra.mxu0 %v1333
  %1345 = vmatpush.bf16.msra.mxu0 %v1332
  %1346 = vmatpush.bf16.msra.mxu0 %v1331
  %1347 = vmatpush.bf16.msra.mxu0 %v1330
  %1348 = vmatpush.bf16.msra.mxu0 %v1329
  %1349 = vmatpush.bf16.msra.mxu0 %v1328
  %1350 = vmatpush.bf16.msra.mxu0 %v1327
  %1351 = vmatmul.bf16.gmra.mxu0 %v1274
  %v1352 = vpop.f32.mrf.mxu0
  %v1353 = vadd.f32 %v1293, %v1352
  %v1354 = vpop.f32.mrf.mxu0
  %1355 = vdwg.mxu0
  %v1356 = vmax.f32 %v1353, 0.0
  %v1357 = vpack.c.bf16 %v1356, %v1356
  %v1358 = vld [vmem:[%s7] sm:$0xf]
  %v1359 = vld [vmem:[%s7 + $0x4] sm:$0xf]
  %v1360 = vld [vmem:[%s7 + $0x8] sm:$0xf]
  %v1361 = vld [vmem:[%s7 + $0xc] sm:$0xf]
  %v1362 = vld [vmem:[%s7 + $0x10] sm:$0xf]
  %v1363 = vld [vmem:[%s7 + $0x14] sm:$0xf]
  %v1364 = vld [vmem:[%s7 + $0x18] sm:$0xf]
  %v1365 = vld [vmem:[%s7 + $0x1c] sm:$0xf]
  %v1366 = vld [vmem:[%s7 + $0x20] sm:$0xf]
  %v1367 = vld [vmem:[%s7 + $0x24] sm:$0xf]
  %v1368 = vld [vmem:[%s7 + $0x28] sm:$0xf]
  %v1369 = vld [vmem:[%s7 + $0x2c] sm:$0xf]
  %v1370 = vld [vmem:[%s7 + $0x30] sm:$0xf]
  %v1371 = vld [vmem:[%s7 + $0x34] sm:$0xf]
  %v1372 = vld [vmem:[%s7 + $0x38] sm:$0xf]
  %v1373 = vld [vmem:[%s7 + $0x3c] sm:$0xf]
  %v1374 = vld [vmem:[%s8] sm:$0x1]
  %v1376 = vperm.slane %v1374, 0
  %v1394 = vunpack.c.l.b16 %v1358
  %v1395 = vunpack.c.l.b16 %v1359
  %v1396 = vunpack.c.l.b16 %v1360
  %v1397 = vunpack.c.l.b16 %v1361
  %v1398 = vunpack.c.l.b16 %v1362
  %v1399 = vunpack.c.l.b16 %v1363
  %v1400 = vunpack.c.l.b16 %v1364
  %v1401 = vunpack.c.l.b16 %v1365
  %v1402 = vunpack.c.l.b16 %v1366
  %v1403 = vunpack.c.l.b16 %v1367
  %v1404 = vunpack.c.l.b16 %v1368
  %v1405 = vunpack.c.l.b16 %v1369
  %v1406 = vunpack.c.l.b16 %v1370
  %v1407 = vunpack.c.l.b16 %v1371
  %v1408 = vunpack.c.l.b16 %v1372
  %v1409 = vunpack.c.l.b16 %v1373
  %v1410 = vpack.c.b16 %v1395, %v1394
  %v1411 = vpack.c.b16 %v1397, %v1396
  %v1412 = vpack.c.b16 %v1399, %v1398
  %v1413 = vpack.c.b16 %v1401, %v1400
  %v1414 = vpack.c.b16 %v1403, %v1402
  %v1415 = vpack.c.b16 %v1405, %v1404
  %v1416 = vpack.c.b16 %v1407, %v1406
  %v1417 = vpack.c.b16 %v1409, %v1408
  %1426 = vmatpush.bf16.msra.mxu0 %v1417
  %1427 = vmatpush.bf16.msra.mxu0 %v1416
  %1428 = vmatpush.bf16.msra.mxu0 %v1415
  %1429 = vmatpush.bf16.msra.mxu0 %v1414
  %1430 = vmatpush.bf16.msra.mxu0 %v1413
  %1431 = vmatpush.bf16.msra.mxu0 %v1412
  %1432 = vmatpush.bf16.msra.mxu0 %v1411
  %1433 = vmatpush.bf16.msra.mxu0 %v1410
  %1434 = vmatmul.bf16.gmra.mxu0 %v1357
  %v1435 = vpop.f32.mrf.mxu0
  %v1436 = vadd.f32 %v1376, %v1435
  %v1437 = vpop.f32.mrf.mxu0
  %1438 = vdwg.mxu0
  %v1439 = vmax.f32 %v1436, 0.0
  %v1440 = vpack.c.bf16 %v1439, %v1439
  %v1441 = vld [vmem:[%s9] sm:$0xf]
  %v1442 = vld [vmem:[%s9 + $0x4] sm:$0xf]
  %v1443 = vld [vmem:[%s9 + $0x8] sm:$0xf]
  %v1444 = vld [vmem:[%s9 + $0xc] sm:$0xf]
  %v1445 = vld [vmem:[%s9 + $0x10] sm:$0xf]
  %v1446 = vld [vmem:[%s9 + $0x14] sm:$0xf]
  %v1447 = vld [vmem:[%s9 + $0x18] sm:$0xf]
  %v1448 = vld [vmem:[%s9 + $0x1c] sm:$0xf]
  %v1449 = vld [vmem:[%s9 + $0x20] sm:$0xf]
  %v1450 = vld [vmem:[%s9 + $0x24] sm:$0xf]
  %v1451 = vld [vmem:[%s9 + $0x28] sm:$0xf]
  %v1452 = vld [vmem:[%s9 + $0x2c] sm:$0xf]
  %v1453 = vld [vmem:[%s9 + $0x30] sm:$0xf]
  %v1454 = vld [vmem:[%s9 + $0x34] sm:$0xf]
  %v1455 = vld [vmem:[%s9 + $0x38] sm:$0xf]
  %v1456 = vld [vmem:[%s9 + $0x3c] sm:$0xf]
  %v1457 = vld [vmem:[%s10] sm:$0x1]
  %v1459 = vperm.slane %v1457, 0
  %v1477 = vunpack.c.l.b16 %v1441
  %v1478 = vunpack.c.l.b16 %v1442
  %v1479 = vunpack.c.l.b16 %v1443
  %v1480 = vunpack.c.l.b16 %v1444
  %v1481 = vunpack.c.l.b16 %v1445
  %v1482 = vunpack.c.l.b16 %v1446
  %v1483 = vunpack.c.l.b16 %v1447
  %v1484 = vunpack.c.l.b16 %v1448
  %v1485 = vunpack.c.l.b16 %v1449
  %v1486 = vunpack.c.l.b16 %v1450
  %v1487 = vunpack.c.l.b16 %v1451
  %v1488 = vunpack.c.l.b16 %v1452
  %v1489 = vunpack.c.l.b16 %v1453
  %v1490 = vunpack.c.l.b16 %v1454
  %v1491 = vunpack.c.l.b16 %v1455
  %v1492 = vunpack.c.l.b16 %v1456
  %v1493 = vpack.c.b16 %v1478, %v1477
  %v1494 = vpack.c.b16 %v1480, %v1479
  %v1495 = vpack.c.b16 %v1482, %v1481
  %v1496 = vpack.c.b16 %v1484, %v1483
  %v1497 = vpack.c.b16 %v1486, %v1485
  %v1498 = vpack.c.b16 %v1488, %v1487
  %v1499 = vpack.c.b16 %v1490, %v1489
  %v1500 = vpack.c.b16 %v1492, %v1491
  %1509 = vmatpush.bf16.msra.mxu0 %v1500
  %1510 = vmatpush.bf16.msra.mxu0 %v1499
  %1511 = vmatpush.bf16.msra.mxu0 %v1498
  %1512 = vmatpush.bf16.msra.mxu0 %v1497
  %1513 = vmatpush.bf16.msra.mxu0 %v1496
  %1514 = vmatpush.bf16.msra.mxu0 %v1495
  %1515 = vmatpush.bf16.msra.mxu0 %v1494
  %1516 = vmatpush.bf16.msra.mxu0 %v1493
  %1517 = vmatmul.bf16.gmra.mxu0 %v1440
  %v1518 = vpop.f32.mrf.mxu0
  %v1519 = vadd.f32 %v1459, %v1518
  %v1520 = vpop.f32.mrf.mxu0
  %1521 = vdwg.mxu0
  %1522 = vst [vmem:[%s11] sm:$0xff] %v1519
  // Predicated region
  $region46: #{conv_dqn_forward.3} parent=0 // pred_check
    _
  $region47: #{conv_dqn_forward.3} parent=0 // pred_check_branch
    %1524 = sbr.rel (0) target = $region49
  $region48: #{conv_dqn_forward.3} parent=0 // pred_region
    _
  $region49: #{conv_dqn_forward.3} parent=0 // pred_fallthru
    _
  // Predicated region
  $region50: #{conv_dqn_forward.3} parent=0 // pred_check
    _
  $region51: #{conv_dqn_forward.3} parent=0 // pred_check_branch
    %1526 = sbr.rel (0) target = $region53
  $region52: #{conv_dqn_forward.3} parent=0 // pred_region
    _
  $region53: #{conv_dqn_forward.3} parent=0 // pred_fallthru
    _

</llo_original>
